<compile_context>
chip_gen: v6e
topology: v6e:2x2x1
jax: 0.10.0
libtpu: 0.0.40
codegen_flags: <defaults>
</compile_context>

<pallas_src>
import math
import functools

import numpy as np
import jax
import jax.numpy as jnp
from jax.experimental import pallas as pl
from jax.experimental.pallas import tpu as pltpu


# ---------------------------------------------------------------------------
# kernel
# ---------------------------------------------------------------------------
def _mhsa_kernel(xq_ref, xkv_ref, wq_ref, bq_ref, wkv_ref, bkv_ref, wp_ref, bp_ref,
                 o_ref, *, n_head, unroll, approx_recip):
    cd = wq_ref.dtype                      # MXU operand dtype (bf16 or f32)
    xq = xq_ref[...]                       # (Tq, C), compute dtype
    xkv = xkv_ref[...]                     # (T , C), compute dtype
    tq, C = xq.shape
    hd = C // n_head

    # Projections (MXU, f32 accumulation). 1/sqrt(hd) is pre-folded into wq/bq.
    q = jnp.dot(xq, wq_ref[...], preferred_element_type=jnp.float32) + bq_ref[...]      # (Tq, C)
    kv = jnp.dot(xkv, wkv_ref[...], preferred_element_type=jnp.float32) + bkv_ref[...]  # (T, 2C)
    k = kv[:, :C].astype(cd)               # 128-aligned lane slice (C % 128 == 0) -> cheap
    v = kv[:, C:]                          # kept f32; masked + cast per head

    # lane index, hoisted out of the head loop (only scalar compares happen per head)
    lane = jax.lax.broadcasted_iota(jnp.int32, (1, C), 1)

    def head_body(h, y_acc):
        lo = h * hd
        m = (lane >= lo) & (lane < lo + hd)                      # (1, C): this head's lanes
        qh = jnp.where(m, q, 0.0).astype(cd)                     # zero other heads' lanes (exact)
        # full-width contraction; zeroed lanes contribute nothing -> per-head QK^T
        s = jax.lax.dot_general(qh, k, (((1,), (1,)), ((), ())),
                                preferred_element_type=jnp.float32)       # (Tq, T)
        s = s - jnp.max(s, axis=-1, keepdims=True)
        e = jnp.exp(s)                                           # f32 softmax stats
        denom = jnp.sum(e, axis=-1, keepdims=True)
        vh = jnp.where(m, v, 0.0).astype(cd)                     # (T, C), only head lanes nonzero
        yh = jnp.dot(e.astype(cd), vh, preferred_element_type=jnp.float32)  # (Tq, C) head slab
        # normalize AFTER the PV matmul; reciprocal goes to the EUP slot
        inv = pl.reciprocal(denom, approx=approx_recip)
        return y_acc + yh * inv

    y = jax.lax.fori_loop(0, n_head, head_body,
                          jnp.zeros((tq, C), jnp.float32), unroll=unroll)

    # single output projection over all heads: (Tq, C) x (C, C)
    o_ref[...] = (jnp.dot(y.astype(cd), wp_ref[...], preferred_element_type=jnp.float32)
                  + bp_ref[...]).astype(o_ref.dtype)


# ---------------------------------------------------------------------------
# one-time parameter prep (hoisted out of the per-call path)
# ---------------------------------------------------------------------------
def prepare_params(wq, bq, wk, bk, wv, bv, wp, bp, *, n_head,
                   compute_dtype=jnp.bfloat16):
    """Fold 1/sqrt(hd) into the Q projection, fuse K/V weights, cast MXU operands."""
    C = wq.shape[0]
    assert C % n_head == 0
    scale = 1.0 / math.sqrt(C // n_head)
    return dict(
        wq=(wq * scale).astype(compute_dtype),
        bq=(bq * scale).astype(jnp.float32),
        wkv=jnp.concatenate([wk, wv], axis=1).astype(compute_dtype),
        bkv=jnp.concatenate([bk, bv], axis=1).astype(jnp.float32),
        wp=wp.astype(compute_dtype),
        bp=bp.astype(jnp.float32),
    )


def _default_vmem_limit_bytes():
    # ~3/4 of physical VMEM, capped: ~96 MiB on v5e/v6e (128 MiB), 48 MiB on v7x (64 MiB).
    try:
        cap = pltpu.get_tpu_info().vmem_capacity_bytes
        return int(min(cap * 3 // 4, 100 * 1024 * 1024))
    except Exception:
        return 48 * 1024 * 1024


# ---------------------------------------------------------------------------
# pallas_call wrapper
# ---------------------------------------------------------------------------
def self_attention_pallas(x, params, *, n_head, q_block=None,
                          out_dtype=jnp.float32, approx_reciprocal=True,
                          vmem_limit_bytes=None):
    B, T, C = x.shape
    assert C % n_head == 0
    assert C % 128 == 0, "C must be a multiple of 128 for lane-dense tiles"
    cd = params["wq"].dtype
    x_c = x.astype(cd)

    if q_block is None:
        q_block = T
    assert T % q_block == 0
    assert q_block == T or q_block % 8 == 0   # (16 preferred for bf16 inputs)
    n_q = T // q_block

    if vmem_limit_bytes is None:
        vmem_limit_bytes = _default_vmem_limit_bytes()

    def _const_spec(arr):
        # full-array block, constant block index across the grid (re-DMA is skipped)
        nd = arr.ndim
        return pl.BlockSpec(arr.shape, lambda b, qi: (0,) * nd)

    xq_spec = pl.BlockSpec((pl.Squeezed(), q_block, C), lambda b, qi: (b, qi, 0))
    xkv_spec = pl.BlockSpec((pl.Squeezed(), T, C), lambda b, qi: (b, 0, 0))
    out_spec = pl.BlockSpec((pl.Squeezed(), q_block, C), lambda b, qi: (b, qi, 0))

    kernel = functools.partial(_mhsa_kernel, n_head=n_head,
                               unroll=(n_head <= 8), approx_recip=approx_reciprocal)

    # x is passed twice: once tiled over the query axis, once full-T for the K/V projection.
    return pl.pallas_call(
        kernel,
        grid=(B, n_q),
        in_specs=[xq_spec, xkv_spec,
                  _const_spec(params["wq"]), _const_spec(params["bq"]),
                  _const_spec(params["wkv"]), _const_spec(params["bkv"]),
                  _const_spec(params["wp"]), _const_spec(params["bp"])],
        out_specs=out_spec,
        out_shape=jax.ShapeDtypeStruct((B, T, C), out_dtype),
        compiler_params=pltpu.CompilerParams(
            dimension_semantics=("parallel", "parallel"),
            vmem_limit_bytes=vmem_limit_bytes),
    )(x_c, x_c, params["wq"], params["bq"], params["wkv"], params["bkv"],
      params["wp"], params["bp"])


# ---------------------------------------------------------------------------
# pure-JAX reference (mirrors the PyTorch forward, eval mode, mask=None)
# ---------------------------------------------------------------------------
def self_attention_ref(x, wq, bq, wk, bk, wv, bv, wp, bp, n_head):
    hp = jax.lax.Precision.HIGHEST
    B, T, C = x.shape
    hd = C // n_head
    q = jnp.matmul(x, wq, precision=hp) + bq
    k = jnp.matmul(x, wk, precision=hp) + bk
    v = jnp.matmul(x, wv, precision=hp) + bv
    qh = q.reshape(B, T, n_head, hd).transpose(0, 2, 1, 3)
    kh = k.reshape(B, T, n_head, hd).transpose(0, 2, 1, 3)
    vh = v.reshape(B, T, n_head, hd).transpose(0, 2, 1, 3)
    att = jnp.einsum("bhqd,bhkd->bhqk", qh, kh, precision=hp) / math.sqrt(hd)
    att = jax.nn.softmax(att, axis=-1)
    y = jnp.einsum("bhqk,bhkd->bhqd", att, vh, precision=hp)
    y = y.transpose(0, 2, 1, 3).reshape(B, T, C)
    return jnp.matmul(y, wp, precision=hp) + bp


# ---------------------------------------------------------------------------
if __name__ == "__main__":
    # small config consistent with the module: n_embd=128, n_head=4 (head_dim=32)
    B, T, C, H = 2, 32, 128, 4
    Q_BLOCK = 16            # 2 query tiles per batch -> grid=(2, 2), both axes parallel

    key = jax.random.PRNGKey(0)
    ks = jax.random.split(key, 9)

    def lin_w(k, din, dout):     # weights stored (in, out) so the kernel computes x @ W + b
        return jax.random.normal(k, (din, dout), jnp.float32) * 0.02

    def lin_b(k, d):
        return jax.random.normal(k, (1, d), jnp.float32) * 0.02

    wq, wk, wv, wp = (lin_w(ks[0], C, C), lin_w(ks[1], C, C),
                      lin_w(ks[2], C, C), lin_w(ks[3], C, C))
    bq, bk, bv, bp = lin_b(ks[4], C), lin_b(ks[5], C), lin_b(ks[6], C), lin_b(ks[7], C)
    x = jax.random.normal(ks[8], (B, T, C), jnp.float32)

    ref = self_attention_ref(x, wq, bq, wk, bk, wv, bv, wp, bp, H)

    fwd = jax.jit(functools.partial(self_attention_pallas, n_head=H, q_block=Q_BLOCK))

    # 1) f32 MXU operands — tight check against the f32 reference.
    p32 = prepare_params(wq, bq, wk, bk, wv, bv, wp, bp, n_head=H,
                         compute_dtype=jnp.float32)
    out32 = jax.block_until_ready(fwd(x, p32))
    assert out32.shape == (B, T, C), out32.shape
    assert bool(jnp.all(jnp.isfinite(out32)))
    np.testing.assert_allclose(np.asarray(out32), np.asarray(ref), rtol=2e-2, atol=5e-3)

    # 2) default bf16 MXU operands (f32 softmax stats / accumulation) — looser check.
    pbf = prepare_params(wq, bq, wk, bk, wv, bv, wp, bp, n_head=H)   # bf16 default
    outbf = jax.block_until_ready(fwd(x, pbf))
    assert outbf.shape == (B, T, C), outbf.shape
    assert bool(jnp.all(jnp.isfinite(outbf)))
    np.testing.assert_allclose(np.asarray(outbf), np.asarray(ref), rtol=1e-1, atol=2e-2)

    print("KERNEL_OK")
</pallas_src>

<mosaic_0001>
module attributes {stable_mosaic.version = 11 : i64} {
  func.func @_mhsa_kernel(%arg0: i32, %arg1: i32, %arg2: memref<1x16x128xf32, #tpu.memory_space<vmem>>, %arg3: memref<1x32x128xf32, #tpu.memory_space<vmem>>, %arg4: memref<128x128xf32, #tpu.memory_space<vmem>>, %arg5: memref<1x128xf32, #tpu.memory_space<vmem>>, %arg6: memref<128x256xf32, #tpu.memory_space<vmem>>, %arg7: memref<1x256xf32, #tpu.memory_space<vmem>>, %arg8: memref<128x128xf32, #tpu.memory_space<vmem>>, %arg9: memref<1x128xf32, #tpu.memory_space<vmem>>, %arg10: memref<1x16x128xf32, #tpu.memory_space<vmem>>) attributes {dimension_semantics = [#tpu.dimension_semantics<parallel>, #tpu.dimension_semantics<parallel>], iteration_bounds = array<i64: 2, 2>, scalar_prefetch = 0 : i64, scratch_operands = 0 : i64, tpu.core_type = #tpu.core_type<tc>, window_params = [{transform_indices = @transform_0, window_bounds = array<i64: 1, 16, 128>}, {transform_indices = @transform_1, window_bounds = array<i64: 1, 32, 128>}, {pipeline_mode = #tpu.pipeline_mode<synchronous>, transform_indices = @transform_2, window_bounds = array<i64: 128, 128>}, {pipeline_mode = #tpu.pipeline_mode<synchronous>, transform_indices = @transform_3, window_bounds = array<i64: 1, 128>}, {pipeline_mode = #tpu.pipeline_mode<synchronous>, transform_indices = @transform_4, window_bounds = array<i64: 128, 256>}, {pipeline_mode = #tpu.pipeline_mode<synchronous>, transform_indices = @transform_5, window_bounds = array<i64: 1, 256>}, {pipeline_mode = #tpu.pipeline_mode<synchronous>, transform_indices = @transform_6, window_bounds = array<i64: 128, 128>}, {pipeline_mode = #tpu.pipeline_mode<synchronous>, transform_indices = @transform_7, window_bounds = array<i64: 1, 128>}, {transform_indices = @transform_8, window_bounds = array<i64: 1, 16, 128>}]} {
    %c0 = arith.constant 0 : index
    %c0_0 = arith.constant 0 : index
    %c0_1 = arith.constant 0 : index
    %0 = vector.load %arg2[%c0, %c0_0, %c0_1] : memref<1x16x128xf32, #tpu.memory_space<vmem>>, vector<1x16x128xf32>
    %1 = vector.shape_cast %0 : vector<1x16x128xf32> to vector<16x128xf32>
    %c0_2 = arith.constant 0 : index
    %c0_3 = arith.constant 0 : index
    %c0_4 = arith.constant 0 : index
    %2 = vector.load %arg3[%c0_2, %c0_3, %c0_4] : memref<1x32x128xf32, #tpu.memory_space<vmem>>, vector<1x32x128xf32>
    %3 = vector.shape_cast %2 : vector<1x32x128xf32> to vector<32x128xf32>
    %c0_5 = arith.constant 0 : index
    %c0_6 = arith.constant 0 : index
    %4 = vector.load %arg4[%c0_5, %c0_6] : memref<128x128xf32, #tpu.memory_space<vmem>>, vector<128x128xf32>
    %cst = arith.constant dense<0.000000e+00> : vector<16x128xf32>
    %5 = tpu.matmul %1, %4, %cst {dimension_numbers = #tpu.dot_dimension_numbers<[1], [0], [0], [1], [0, 0, 1, 1], [], []>} : vector<16x128xf32>, vector<128x128xf32>, vector<16x128xf32> -> vector<16x128xf32>
    %c0_7 = arith.constant 0 : index
    %c0_8 = arith.constant 0 : index
    %6 = vector.load %arg5[%c0_7, %c0_8] : memref<1x128xf32, #tpu.memory_space<vmem>>, vector<1x128xf32>
    %7 = vector.broadcast %6 : vector<1x128xf32> to vector<16x128xf32>
    %8 = arith.addf %5, %7 : vector<16x128xf32>
    %c0_9 = arith.constant 0 : index
    %c0_10 = arith.constant 0 : index
    %9 = vector.load %arg6[%c0_9, %c0_10] : memref<128x256xf32, #tpu.memory_space<vmem>>, vector<128x256xf32>
    %cst_11 = arith.constant dense<0.000000e+00> : vector<32x256xf32>
    %10 = tpu.matmul %3, %9, %cst_11 {dimension_numbers = #tpu.dot_dimension_numbers<[1], [0], [0], [1], [0, 0, 1, 1], [], []>} : vector<32x128xf32>, vector<128x256xf32>, vector<32x256xf32> -> vector<32x256xf32>
    %c0_12 = arith.constant 0 : index
    %c0_13 = arith.constant 0 : index
    %11 = vector.load %arg7[%c0_12, %c0_13] : memref<1x256xf32, #tpu.memory_space<vmem>>, vector<1x256xf32>
    %12 = vector.broadcast %11 : vector<1x256xf32> to vector<32x256xf32>
    %13 = arith.addf %10, %12 : vector<32x256xf32>
    %14 = vector.extract_strided_slice %13 {offsets = [0, 0], sizes = [32, 128], strides = [1, 1]} : vector<32x256xf32> to vector<32x128xf32>
    %15 = vector.extract_strided_slice %13 {offsets = [0, 128], sizes = [32, 128], strides = [1, 1]} : vector<32x256xf32> to vector<32x128xf32>
    %16 = tpu.iota {dimensions = array<i32: 1>} : vector<1x128xi32>
    %cst_14 = arith.constant 0.000000e+00 : f32
    %17 = vector.broadcast %cst_14 : f32 to vector<16x128xf32>
    %c0_i32 = arith.constant 0 : i32
    %c32_i32 = arith.constant 32 : i32
    %18 = arith.muli %c0_i32, %c32_i32 : i32
    %19 = vector.broadcast %18 : i32 to vector<1x128xi32>
    %20 = arith.cmpi sge, %16, %19 : vector<1x128xi32>
    %c32_i32_15 = arith.constant 32 : i32
    %21 = arith.addi %18, %c32_i32_15 : i32
    %22 = vector.broadcast %21 : i32 to vector<1x128xi32>
    %23 = arith.cmpi slt, %16, %22 : vector<1x128xi32>
    %24 = arith.andi %20, %23 : vector<1x128xi1>
    %cst_16 = arith.constant 0.000000e+00 : f32
    %25 = vector.shape_cast %24 : vector<1x128xi1> to vector<1x128xi1>
    %26 = vector.broadcast %25 : vector<1x128xi1> to vector<16x128xi1>
    %27 = vector.broadcast %cst_16 : f32 to vector<16x128xf32>
    %28 = arith.select %26, %8, %27 : vector<16x128xi1>, vector<16x128xf32>
    %cst_17 = arith.constant dense<0.000000e+00> : vector<16x32xf32>
    %29 = tpu.matmul %28, %14, %cst_17 {dimension_numbers = #tpu.dot_dimension_numbers<[1], [1], [0], [0], [0, 0, 1, 0], [], []>} : vector<16x128xf32>, vector<32x128xf32>, vector<16x32xf32> -> vector<16x32xf32>
    %cst_18 = arith.constant dense<0xFF800000> : vector<16xf32>
    %30 = vector.multi_reduction <maximumf>, %29, %cst_18 [1] : vector<16x32xf32> to vector<16xf32>
    %31 = vector.shape_cast %30 : vector<16xf32> to vector<16x1xf32>
    %32 = vector.broadcast %31 : vector<16x1xf32> to vector<16x32xf32>
    %33 = arith.subf %29, %32 : vector<16x32xf32>
    %34 = math.exp %33 : vector<16x32xf32>
    %cst_19 = arith.constant dense<0.000000e+00> : vector<16xf32>
    %35 = vector.multi_reduction <add>, %34, %cst_19 [1] : vector<16x32xf32> to vector<16xf32>
    %36 = vector.shape_cast %35 : vector<16xf32> to vector<16x1xf32>
    %cst_20 = arith.constant 0.000000e+00 : f32
    %37 = vector.shape_cast %24 : vector<1x128xi1> to vector<1x128xi1>
    %38 = vector.broadcast %37 : vector<1x128xi1> to vector<32x128xi1>
    %39 = vector.broadcast %cst_20 : f32 to vector<32x128xf32>
    %40 = arith.select %38, %15, %39 : vector<32x128xi1>, vector<32x128xf32>
    %cst_21 = arith.constant dense<0.000000e+00> : vector<16x128xf32>
    %41 = tpu.matmul %34, %40, %cst_21 {dimension_numbers = #tpu.dot_dimension_numbers<[1], [0], [0], [1], [0, 0, 1, 1], [], []>} : vector<16x32xf32>, vector<32x128xf32>, vector<16x128xf32> -> vector<16x128xf32>
    %42 = tpu.reciprocal %36 {approx = true} : vector<16x1xf32> -> vector<16x1xf32>
    %43 = vector.broadcast %42 : vector<16x1xf32> to vector<16x128xf32>
    %44 = arith.mulf %41, %43 : vector<16x128xf32>
    %45 = arith.addf %17, %44 : vector<16x128xf32>
    %c1_i32 = arith.constant 1 : i32
    %c32_i32_22 = arith.constant 32 : i32
    %46 = arith.muli %c1_i32, %c32_i32_22 : i32
    %47 = vector.broadcast %46 : i32 to vector<1x128xi32>
    %48 = arith.cmpi sge, %16, %47 : vector<1x128xi32>
    %c32_i32_23 = arith.constant 32 : i32
    %49 = arith.addi %46, %c32_i32_23 : i32
    %50 = vector.broadcast %49 : i32 to vector<1x128xi32>
    %51 = arith.cmpi slt, %16, %50 : vector<1x128xi32>
    %52 = arith.andi %48, %51 : vector<1x128xi1>
    %cst_24 = arith.constant 0.000000e+00 : f32
    %53 = vector.shape_cast %52 : vector<1x128xi1> to vector<1x128xi1>
    %54 = vector.broadcast %53 : vector<1x128xi1> to vector<16x128xi1>
    %55 = vector.broadcast %cst_24 : f32 to vector<16x128xf32>
    %56 = arith.select %54, %8, %55 : vector<16x128xi1>, vector<16x128xf32>
    %cst_25 = arith.constant dense<0.000000e+00> : vector<16x32xf32>
    %57 = tpu.matmul %56, %14, %cst_25 {dimension_numbers = #tpu.dot_dimension_numbers<[1], [1], [0], [0], [0, 0, 1, 0], [], []>} : vector<16x128xf32>, vector<32x128xf32>, vector<16x32xf32> -> vector<16x32xf32>
    %cst_26 = arith.constant dense<0xFF800000> : vector<16xf32>
    %58 = vector.multi_reduction <maximumf>, %57, %cst_26 [1] : vector<16x32xf32> to vector<16xf32>
    %59 = vector.shape_cast %58 : vector<16xf32> to vector<16x1xf32>
    %60 = vector.broadcast %59 : vector<16x1xf32> to vector<16x32xf32>
    %61 = arith.subf %57, %60 : vector<16x32xf32>
    %62 = math.exp %61 : vector<16x32xf32>
    %cst_27 = arith.constant dense<0.000000e+00> : vector<16xf32>
    %63 = vector.multi_reduction <add>, %62, %cst_27 [1] : vector<16x32xf32> to vector<16xf32>
    %64 = vector.shape_cast %63 : vector<16xf32> to vector<16x1xf32>
    %cst_28 = arith.constant 0.000000e+00 : f32
    %65 = vector.shape_cast %52 : vector<1x128xi1> to vector<1x128xi1>
    %66 = vector.broadcast %65 : vector<1x128xi1> to vector<32x128xi1>
    %67 = vector.broadcast %cst_28 : f32 to vector<32x128xf32>
    %68 = arith.select %66, %15, %67 : vector<32x128xi1>, vector<32x128xf32>
    %cst_29 = arith.constant dense<0.000000e+00> : vector<16x128xf32>
    %69 = tpu.matmul %62, %68, %cst_29 {dimension_numbers = #tpu.dot_dimension_numbers<[1], [0], [0], [1], [0, 0, 1, 1], [], []>} : vector<16x32xf32>, vector<32x128xf32>, vector<16x128xf32> -> vector<16x128xf32>
    %70 = tpu.reciprocal %64 {approx = true} : vector<16x1xf32> -> vector<16x1xf32>
    %71 = vector.broadcast %70 : vector<16x1xf32> to vector<16x128xf32>
    %72 = arith.mulf %69, %71 : vector<16x128xf32>
    %73 = arith.addf %45, %72 : vector<16x128xf32>
    %c2_i32 = arith.constant 2 : i32
    %c32_i32_30 = arith.constant 32 : i32
    %74 = arith.muli %c2_i32, %c32_i32_30 : i32
    %75 = vector.broadcast %74 : i32 to vector<1x128xi32>
    %76 = arith.cmpi sge, %16, %75 : vector<1x128xi32>
    %c32_i32_31 = arith.constant 32 : i32
    %77 = arith.addi %74, %c32_i32_31 : i32
    %78 = vector.broadcast %77 : i32 to vector<1x128xi32>
    %79 = arith.cmpi slt, %16, %78 : vector<1x128xi32>
    %80 = arith.andi %76, %79 : vector<1x128xi1>
    %cst_32 = arith.constant 0.000000e+00 : f32
    %81 = vector.shape_cast %80 : vector<1x128xi1> to vector<1x128xi1>
    %82 = vector.broadcast %81 : vector<1x128xi1> to vector<16x128xi1>
    %83 = vector.broadcast %cst_32 : f32 to vector<16x128xf32>
    %84 = arith.select %82, %8, %83 : vector<16x128xi1>, vector<16x128xf32>
    %cst_33 = arith.constant dense<0.000000e+00> : vector<16x32xf32>
    %85 = tpu.matmul %84, %14, %cst_33 {dimension_numbers = #tpu.dot_dimension_numbers<[1], [1], [0], [0], [0, 0, 1, 0], [], []>} : vector<16x128xf32>, vector<32x128xf32>, vector<16x32xf32> -> vector<16x32xf32>
    %cst_34 = arith.constant dense<0xFF800000> : vector<16xf32>
    %86 = vector.multi_reduction <maximumf>, %85, %cst_34 [1] : vector<16x32xf32> to vector<16xf32>
    %87 = vector.shape_cast %86 : vector<16xf32> to vector<16x1xf32>
    %88 = vector.broadcast %87 : vector<16x1xf32> to vector<16x32xf32>
    %89 = arith.subf %85, %88 : vector<16x32xf32>
    %90 = math.exp %89 : vector<16x32xf32>
    %cst_35 = arith.constant dense<0.000000e+00> : vector<16xf32>
    %91 = vector.multi_reduction <add>, %90, %cst_35 [1] : vector<16x32xf32> to vector<16xf32>
    %92 = vector.shape_cast %91 : vector<16xf32> to vector<16x1xf32>
    %cst_36 = arith.constant 0.000000e+00 : f32
    %93 = vector.shape_cast %80 : vector<1x128xi1> to vector<1x128xi1>
    %94 = vector.broadcast %93 : vector<1x128xi1> to vector<32x128xi1>
    %95 = vector.broadcast %cst_36 : f32 to vector<32x128xf32>
    %96 = arith.select %94, %15, %95 : vector<32x128xi1>, vector<32x128xf32>
    %cst_37 = arith.constant dense<0.000000e+00> : vector<16x128xf32>
    %97 = tpu.matmul %90, %96, %cst_37 {dimension_numbers = #tpu.dot_dimension_numbers<[1], [0], [0], [1], [0, 0, 1, 1], [], []>} : vector<16x32xf32>, vector<32x128xf32>, vector<16x128xf32> -> vector<16x128xf32>
    %98 = tpu.reciprocal %92 {approx = true} : vector<16x1xf32> -> vector<16x1xf32>
    %99 = vector.broadcast %98 : vector<16x1xf32> to vector<16x128xf32>
    %100 = arith.mulf %97, %99 : vector<16x128xf32>
    %101 = arith.addf %73, %100 : vector<16x128xf32>
    %c3_i32 = arith.constant 3 : i32
    %c32_i32_38 = arith.constant 32 : i32
    %102 = arith.muli %c3_i32, %c32_i32_38 : i32
    %103 = vector.broadcast %102 : i32 to vector<1x128xi32>
    %104 = arith.cmpi sge, %16, %103 : vector<1x128xi32>
    %c32_i32_39 = arith.constant 32 : i32
    %105 = arith.addi %102, %c32_i32_39 : i32
    %106 = vector.broadcast %105 : i32 to vector<1x128xi32>
    %107 = arith.cmpi slt, %16, %106 : vector<1x128xi32>
    %108 = arith.andi %104, %107 : vector<1x128xi1>
    %cst_40 = arith.constant 0.000000e+00 : f32
    %109 = vector.shape_cast %108 : vector<1x128xi1> to vector<1x128xi1>
    %110 = vector.broadcast %109 : vector<1x128xi1> to vector<16x128xi1>
    %111 = vector.broadcast %cst_40 : f32 to vector<16x128xf32>
    %112 = arith.select %110, %8, %111 : vector<16x128xi1>, vector<16x128xf32>
    %cst_41 = arith.constant dense<0.000000e+00> : vector<16x32xf32>
    %113 = tpu.matmul %112, %14, %cst_41 {dimension_numbers = #tpu.dot_dimension_numbers<[1], [1], [0], [0], [0, 0, 1, 0], [], []>} : vector<16x128xf32>, vector<32x128xf32>, vector<16x32xf32> -> vector<16x32xf32>
    %cst_42 = arith.constant dense<0xFF800000> : vector<16xf32>
    %114 = vector.multi_reduction <maximumf>, %113, %cst_42 [1] : vector<16x32xf32> to vector<16xf32>
    %115 = vector.shape_cast %114 : vector<16xf32> to vector<16x1xf32>
    %116 = vector.broadcast %115 : vector<16x1xf32> to vector<16x32xf32>
    %117 = arith.subf %113, %116 : vector<16x32xf32>
    %118 = math.exp %117 : vector<16x32xf32>
    %cst_43 = arith.constant dense<0.000000e+00> : vector<16xf32>
    %119 = vector.multi_reduction <add>, %118, %cst_43 [1] : vector<16x32xf32> to vector<16xf32>
    %120 = vector.shape_cast %119 : vector<16xf32> to vector<16x1xf32>
    %cst_44 = arith.constant 0.000000e+00 : f32
    %121 = vector.shape_cast %108 : vector<1x128xi1> to vector<1x128xi1>
    %122 = vector.broadcast %121 : vector<1x128xi1> to vector<32x128xi1>
    %123 = vector.broadcast %cst_44 : f32 to vector<32x128xf32>
    %124 = arith.select %122, %15, %123 : vector<32x128xi1>, vector<32x128xf32>
    %cst_45 = arith.constant dense<0.000000e+00> : vector<16x128xf32>
    %125 = tpu.matmul %118, %124, %cst_45 {dimension_numbers = #tpu.dot_dimension_numbers<[1], [0], [0], [1], [0, 0, 1, 1], [], []>} : vector<16x32xf32>, vector<32x128xf32>, vector<16x128xf32> -> vector<16x128xf32>
    %126 = tpu.reciprocal %120 {approx = true} : vector<16x1xf32> -> vector<16x1xf32>
    %127 = vector.broadcast %126 : vector<16x1xf32> to vector<16x128xf32>
    %128 = arith.mulf %125, %127 : vector<16x128xf32>
    %129 = arith.addf %101, %128 : vector<16x128xf32>
    %c4_i32 = arith.constant 4 : i32
    %c0_46 = arith.constant 0 : index
    %c0_47 = arith.constant 0 : index
    %130 = vector.load %arg8[%c0_46, %c0_47] : memref<128x128xf32, #tpu.memory_space<vmem>>, vector<128x128xf32>
    %cst_48 = arith.constant dense<0.000000e+00> : vector<16x128xf32>
    %131 = tpu.matmul %129, %130, %cst_48 {dimension_numbers = #tpu.dot_dimension_numbers<[1], [0], [0], [1], [0, 0, 1, 1], [], []>} : vector<16x128xf32>, vector<128x128xf32>, vector<16x128xf32> -> vector<16x128xf32>
    %c0_49 = arith.constant 0 : index
    %c0_50 = arith.constant 0 : index
    %132 = vector.load %arg9[%c0_49, %c0_50] : memref<1x128xf32, #tpu.memory_space<vmem>>, vector<1x128xf32>
    %133 = vector.broadcast %132 : vector<1x128xf32> to vector<16x128xf32>
    %134 = arith.addf %131, %133 : vector<16x128xf32>
    %c0_51 = arith.constant 0 : index
    %c0_52 = arith.constant 0 : index
    %c0_53 = arith.constant 0 : index
    %135 = vector.load %arg10[%c0_51, %c0_52, %c0_53] : memref<1x16x128xf32, #tpu.memory_space<vmem>>, vector<1x16x128xf32>
    %136 = vector.shape_cast %135 : vector<1x16x128xf32> to vector<16x128xf32>
    %137 = vector.shape_cast %134 : vector<16x128xf32> to vector<1x16x128xf32>
    tpu.vector_store %arg10[%c0_51, %c0_52, %c0_53], %137 {strides = array<i32>} : memref<1x16x128xf32, #tpu.memory_space<vmem>>, vector<1x16x128xf32>,
    return
  }
  func.func @transform_0(%arg0: i32, %arg1: i32) -> (i32, i32, i32) {
    %c0_i32 = arith.constant 0 : i32
    %c0_i32_0 = arith.constant 0 : i32
    return %arg0, %arg1, %c0_i32 : i32, i32, i32
  }
  func.func @transform_1(%arg0: i32, %arg1: i32) -> (i32, i32, i32) {
    %c0_i32 = arith.constant 0 : i32
    %c0_i32_0 = arith.constant 0 : i32
    %c0_i32_1 = arith.constant 0 : i32
    return %arg0, %c0_i32, %c0_i32_0 : i32, i32, i32
  }
  func.func @transform_2(%arg0: i32, %arg1: i32) -> (i32, i32) {
    %c0_i32 = arith.constant 0 : i32
    %c0_i32_0 = arith.constant 0 : i32
    %c0_i32_1 = arith.constant 0 : i32
    return %c0_i32, %c0_i32_0 : i32, i32
  }
  func.func @transform_3(%arg0: i32, %arg1: i32) -> (i32, i32) {
    %c0_i32 = arith.constant 0 : i32
    %c0_i32_0 = arith.constant 0 : i32
    %c0_i32_1 = arith.constant 0 : i32
    return %c0_i32, %c0_i32_0 : i32, i32
  }
  func.func @transform_4(%arg0: i32, %arg1: i32) -> (i32, i32) {
    %c0_i32 = arith.constant 0 : i32
    %c0_i32_0 = arith.constant 0 : i32
    %c0_i32_1 = arith.constant 0 : i32
    return %c0_i32, %c0_i32_0 : i32, i32
  }
  func.func @transform_5(%arg0: i32, %arg1: i32) -> (i32, i32) {
    %c0_i32 = arith.constant 0 : i32
    %c0_i32_0 = arith.constant 0 : i32
    %c0_i32_1 = arith.constant 0 : i32
    return %c0_i32, %c0_i32_0 : i32, i32
  }
  func.func @transform_6(%arg0: i32, %arg1: i32) -> (i32, i32) {
    %c0_i32 = arith.constant 0 : i32
    %c0_i32_0 = arith.constant 0 : i32
    %c0_i32_1 = arith.constant 0 : i32
    return %c0_i32, %c0_i32_0 : i32, i32
  }
  func.func @transform_7(%arg0: i32, %arg1: i32) -> (i32, i32) {
    %c0_i32 = arith.constant 0 : i32
    %c0_i32_0 = arith.constant 0 : i32
    %c0_i32_1 = arith.constant 0 : i32
    return %c0_i32, %c0_i32_0 : i32, i32
  }
  func.func @transform_8(%arg0: i32, %arg1: i32) -> (i32, i32, i32) {
    %c0_i32 = arith.constant 0 : i32
    %c0_i32_0 = arith.constant 0 : i32
    return %arg0, %arg1, %c0_i32 : i32, i32, i32
  }
}

</mosaic_0001>

<llo_original>
// kernel: self_attention_pallas.1
$region0: #{self_attention_pallas.1}
  #allocation0 [shape = 'u32[]', space=smem, size = 0x4, offset = 0x4, fixed_abs, tag = 'smem constant byte address 0x4 - core index']
  #allocation1 [shape = 'u32[144,128]{1,0:T(1,128)}', space=vmem, size = 0x12000, scoped, tag = 'internal scratch']
  %s0 = inlined_call_operand.hbm [shape: f32[2,32,128], index: 0, kind: input, shape index: {}, may-alias: {0,1}]
  %s1 = inlined_call_operand.hbm [shape: f32[2,32,128], index: 1, kind: input, shape index: {}, may-alias: {0,1}]
  %s2 = inlined_call_operand.hbm [shape: f32[128,128], index: 2, kind: input, shape index: {}]
  %s3 = inlined_call_operand.vmem [shape: f32[1,128], index: 3, kind: input, shape index: {}]
  %s4 = inlined_call_operand.hbm [shape: f32[128,256], index: 4, kind: input, shape index: {}]
  %s5 = inlined_call_operand.hbm [shape: f32[1,256], index: 5, kind: input, shape index: {}]
  %s6 = inlined_call_operand.hbm [shape: f32[128,128], index: 6, kind: input, shape index: {}]
  %s7 = inlined_call_operand.vmem [shape: f32[1,128], index: 7, kind: input, shape index: {}]
  %s8 = inlined_call_operand.hbm [shape: f32[2,32,128], index: 8, kind: output, shape index: {}]
  %s9 = sld [smem:[#allocation0]]
  $region89: #{self_attention_pallas.1} parent=0
    _
  %s11 = ssub.s32 1, %s9
  %s12 = scalar_select 0, %s11, %s9
  $region1: #{self_attention_pallas.1} parent=0
    #allocation2 [shape = 'u8[16384]{0}', space=vmem, size = 0x4000, scoped, tag = 'input window, operand 0']
    #allocation3 [shape = 's32[2]{0}', space=sflag, size = 0x8, scoped, tag = 'scoped memory for self_attention_pallas.1']
    #allocation4 [shape = 's32[2]{0}', space=sflag, size = 0x8, scoped, tag = 'scoped memory for self_attention_pallas.1']
    #allocation5 [shape = 'u8[32768]{0}', space=vmem, size = 0x8000, scoped, tag = 'input window, operand 1']
    #allocation6 [shape = 's32[2]{0}', space=sflag, size = 0x8, scoped, tag = 'scoped memory for self_attention_pallas.1']
    #allocation7 [shape = 'u8[65536]{0}', space=vmem, size = 0x10000, scoped, tag = 'input window, operand 2, single buffered']
    #allocation8 [shape = 'u8[131072]{0}', space=vmem, size = 0x20000, scoped, tag = 'input window, operand 4, single buffered']
    #allocation9 [shape = 's32[1]{0}', space=sflag, size = 0x4, scoped, tag = 'scoped memory for self_attention_pallas.1']
    #allocation10 [shape = 'u8[1024]{0}', space=vmem, size = 0x400, scoped, tag = 'input window, operand 5, single buffered']
    #allocation11 [shape = 'u8[65536]{0}', space=vmem, size = 0x10000, scoped, tag = 'input window, operand 6, single buffered']
    #allocation12 [shape = 's32[1]{0}', space=sflag, size = 0x4, scoped, tag = 'scoped memory for self_attention_pallas.1']
    #allocation13 [shape = 'u8[16384]{0}', space=vmem, size = 0x4000, scoped, tag = 'output window, operand 0']
    %13 = vsyncpa [#allocation3], 0
    %s14 = scalar_lea.sflag [#allocation3], 1
    %15 = vsyncpa %s14, 0
    %16 = vsyncpa [#allocation6], 0
    %s17 = scalar_lea.sflag [#allocation6], 1
    %18 = vsyncpa %s17, 0
    %19 = vsyncpa [#allocation9], 0
    %20 = vsyncpa [#allocation12], 0
    %21 = vsyncpa [#allocation4], 0
    %s22 = scalar_lea.sflag [#allocation4], 1
    %23 = vsyncpa %s22, 0
    loop: start=0, step=1, limit=6
    $region2: #{self_attention_pallas.1} parent=1 // loop_pre_header
      _
    $region3: #{self_attention_pallas.1} parent=1 // loop_header
      %s25 = sphi 0, %s29
      %p26 = scmp.ge.s32.totalorder %s25, 6
      %s32 = sphi 0, %s44
      %s33 = sphi 0, %s40
      %s34 = sphi 0, %s32
      %s35 = sphi 0, %s33
      %s36 = sphi 0, %s34
      %s37 = sphi 0, %s35
      %s49 = sphi 0, %s51
      %s52 = sphi 0, %s49
      %s53 = sphi 0, %s52
      %s69 = sphi 0, %s53
      %s75 = sphi 0, %s77
      %s78 = sphi 0, %s75
      %s79 = sphi 0, %s78
      %s95 = sphi 0, %s79
      %s99 = sphi 0, %s99
      %s101 = sphi 0, %s99
      %s102 = sphi 0, %s101
      %s116 = sphi 0, %s102
      %s120 = sphi 0, %s120
      %s122 = sphi 0, %s120
      %s123 = sphi 0, %s122
      %s137 = sphi 0, %s123
      %s141 = sphi 0, %s141
      %s143 = sphi 0, %s141
      %s144 = sphi 0, %s143
      %s158 = sphi 0, %s144
      %s162 = sphi 0, %s162
      %s164 = sphi 0, %s162
      %s165 = sphi 0, %s164
      %s179 = sphi 0, %s165
      %s183 = sphi 0, %s183
      %s185 = sphi 0, %s183
      %s186 = sphi 0, %s185
      %s200 = sphi 0, %s186
      %s204 = sphi 0, %s204
      %s206 = sphi 0, %s204
      %s207 = sphi 0, %s206
      %s221 = sphi 0, %s207
      %s229 = sphi 0, %s231
      %s232 = sphi 0, %s229
      %s233 = sphi 0, %s232
      %s249 = sphi 0, %s233
    $region4: #{self_attention_pallas.1} parent=1 // loop_header_branch
      %28 = sbr.rel (%p26) target = $region8
    $region5: #{self_attention_pallas.1} parent=1 // loop_body
      %s30 = ssub.s32 %s25, 1
      %s31 = ssub.s32 %s25, 2
      %s38 = sadd.s32 1, %s33
      %p39 = scmp.ge.s32.totalorder %s38, 2
      %s40 = scalar_select %p39, 0, %s38
      %s41 = sadd.s32 1, %s32
      %s42 = scalar_select %p39, %s41, %s32
      %p43 = scmp.ge.s32.totalorder %s42, 2
      %s44 = scalar_select %p43, 0, %s42
      %s45 = ssub.s32 %s32, %s44
      %s46 = ssub.s32 %s33, %s40
      %s47 = sor.u32 %s45, %s46
      %p48 = scmp.eq.s32.totalorder %s47, 0
      %s50 = sadd.s32 %s49, 1
      %s51 = scalar_select %p48, %s49, %s50
      %p54 = pneg %p48
      %p55 = scmp.eq.s32.totalorder %s25, 3
      %p56 = por %p54, %p55
      %p57 = scmp.ne.s32.totalorder %s49, %s52
      %p58 = scmp.eq.s32.totalorder %s25, 0
      %p59 = por %p57, %p58
      %p60 = scmp.ne.s32.totalorder %s49, %s52
      %p61 = scmp.eq.s32.totalorder %s30, 3
      %p62 = por %p60, %p61
      %p63 = scmp.ne.s32.totalorder %s52, %s53
      %p64 = scmp.eq.s32.totalorder %s30, 0
      %p65 = por %p63, %p64
      %p66 = scmp.ne.s32.totalorder %s52, %s53
      %p67 = scmp.eq.s32.totalorder %s31, 3
      %p68 = por %p66, %p67
      %p70 = scmp.ne.s32.totalorder %s53, %s69
      %p71 = scmp.eq.s32.totalorder %s31, 0
      %p72 = por %p70, %p71
      %s73 = ssub.s32 %s32, %s44
      %p74 = scmp.eq.s32.totalorder %s73, 0
      %s76 = sadd.s32 %s75, 1
      %s77 = scalar_select %p74, %s75, %s76
      %p80 = pneg %p74
      %p81 = scmp.eq.s32.totalorder %s25, 3
      %p82 = por %p80, %p81
      %p83 = scmp.ne.s32.totalorder %s75, %s78
      %p84 = scmp.eq.s32.totalorder %s25, 0
      %p85 = por %p83, %p84
      %p86 = scmp.ne.s32.totalorder %s75, %s78
      %p87 = scmp.eq.s32.totalorder %s30, 3
      %p88 = por %p86, %p87
      %p89 = scmp.ne.s32.totalorder %s78, %s79
      %p90 = scmp.eq.s32.totalorder %s30, 0
      %p91 = por %p89, %p90
      %p92 = scmp.ne.s32.totalorder %s78, %s79
      %p93 = scmp.eq.s32.totalorder %s31, 3
      %p94 = por %p92, %p93
      %p96 = scmp.ne.s32.totalorder %s79, %s95
      %p97 = scmp.eq.s32.totalorder %s31, 0
      %p98 = por %p96, %p97
      %s100 = sadd.s32 %s99, 1
      %p103 = scmp.eq.s32.totalorder %s25, 3
      %p104 = scmp.ne.s32.totalorder %s99, %s101
      %p105 = scmp.eq.s32.totalorder %s25, 0
      %p106 = por %p104, %p105
      %p107 = scmp.ne.s32.totalorder %s99, %s101
      %p108 = scmp.eq.s32.totalorder %s30, 3
      %p109 = por %p107, %p108
      %p110 = scmp.ne.s32.totalorder %s101, %s102
      %p111 = scmp.eq.s32.totalorder %s30, 0
      %p112 = por %p110, %p111
      %p113 = scmp.ne.s32.totalorder %s101, %s102
      %p114 = scmp.eq.s32.totalorder %s31, 3
      %p115 = por %p113, %p114
      %p117 = scmp.ne.s32.totalorder %s102, %s116
      %p118 = scmp.eq.s32.totalorder %s31, 0
      %p119 = por %p117, %p118
      %s121 = sadd.s32 %s120, 1
      %p124 = scmp.eq.s32.totalorder %s25, 3
      %p125 = scmp.ne.s32.totalorder %s120, %s122
      %p126 = scmp.eq.s32.totalorder %s25, 0
      %p127 = por %p125, %p126
      %p128 = scmp.ne.s32.totalorder %s120, %s122
      %p129 = scmp.eq.s32.totalorder %s30, 3
      %p130 = por %p128, %p129
      %p131 = scmp.ne.s32.totalorder %s122, %s123
      %p132 = scmp.eq.s32.totalorder %s30, 0
      %p133 = por %p131, %p132
      %p134 = scmp.ne.s32.totalorder %s122, %s123
      %p135 = scmp.eq.s32.totalorder %s31, 3
      %p136 = por %p134, %p135
      %p138 = scmp.ne.s32.totalorder %s123, %s137
      %p139 = scmp.eq.s32.totalorder %s31, 0
      %p140 = por %p138, %p139
      %s142 = sadd.s32 %s141, 1
      %p145 = scmp.eq.s32.totalorder %s25, 3
      %p146 = scmp.ne.s32.totalorder %s141, %s143
      %p147 = scmp.eq.s32.totalorder %s25, 0
      %p148 = por %p146, %p147
      %p149 = scmp.ne.s32.totalorder %s141, %s143
      %p150 = scmp.eq.s32.totalorder %s30, 3
      %p151 = por %p149, %p150
      %p152 = scmp.ne.s32.totalorder %s143, %s144
      %p153 = scmp.eq.s32.totalorder %s30, 0
      %p154 = por %p152, %p153
      %p155 = scmp.ne.s32.totalorder %s143, %s144
      %p156 = scmp.eq.s32.totalorder %s31, 3
      %p157 = por %p155, %p156
      %p159 = scmp.ne.s32.totalorder %s144, %s158
      %p160 = scmp.eq.s32.totalorder %s31, 0
      %p161 = por %p159, %p160
      %s163 = sadd.s32 %s162, 1
      %p166 = scmp.eq.s32.totalorder %s25, 3
      %p167 = scmp.ne.s32.totalorder %s162, %s164
      %p168 = scmp.eq.s32.totalorder %s25, 0
      %p169 = por %p167, %p168
      %p170 = scmp.ne.s32.totalorder %s162, %s164
      %p171 = scmp.eq.s32.totalorder %s30, 3
      %p172 = por %p170, %p171
      %p173 = scmp.ne.s32.totalorder %s164, %s165
      %p174 = scmp.eq.s32.totalorder %s30, 0
      %p175 = por %p173, %p174
      %p176 = scmp.ne.s32.totalorder %s164, %s165
      %p177 = scmp.eq.s32.totalorder %s31, 3
      %p178 = por %p176, %p177
      %p180 = scmp.ne.s32.totalorder %s165, %s179
      %p181 = scmp.eq.s32.totalorder %s31, 0
      %p182 = por %p180, %p181
      %s184 = sadd.s32 %s183, 1
      %p187 = scmp.eq.s32.totalorder %s25, 3
      %p188 = scmp.ne.s32.totalorder %s183, %s185
      %p189 = scmp.eq.s32.totalorder %s25, 0
      %p190 = por %p188, %p189
      %p191 = scmp.ne.s32.totalorder %s183, %s185
      %p192 = scmp.eq.s32.totalorder %s30, 3
      %p193 = por %p191, %p192
      %p194 = scmp.ne.s32.totalorder %s185, %s186
      %p195 = scmp.eq.s32.totalorder %s30, 0
      %p196 = por %p194, %p195
      %p197 = scmp.ne.s32.totalorder %s185, %s186
      %p198 = scmp.eq.s32.totalorder %s31, 3
      %p199 = por %p197, %p198
      %p201 = scmp.ne.s32.totalorder %s186, %s200
      %p202 = scmp.eq.s32.totalorder %s31, 0
      %p203 = por %p201, %p202
      %s205 = sadd.s32 %s204, 1
      %p208 = scmp.eq.s32.totalorder %s25, 3
      %p209 = scmp.ne.s32.totalorder %s204, %s206
      %p210 = scmp.eq.s32.totalorder %s25, 0
      %p211 = por %p209, %p210
      %p212 = scmp.ne.s32.totalorder %s204, %s206
      %p213 = scmp.eq.s32.totalorder %s30, 3
      %p214 = por %p212, %p213
      %p215 = scmp.ne.s32.totalorder %s206, %s207
      %p216 = scmp.eq.s32.totalorder %s30, 0
      %p217 = por %p215, %p216
      %p218 = scmp.ne.s32.totalorder %s206, %s207
      %p219 = scmp.eq.s32.totalorder %s31, 3
      %p220 = por %p218, %p219
      %p222 = scmp.ne.s32.totalorder %s207, %s221
      %p223 = scmp.eq.s32.totalorder %s31, 0
      %p224 = por %p222, %p223
      %s225 = ssub.s32 %s32, %s44
      %s226 = ssub.s32 %s33, %s40
      %s227 = sor.u32 %s225, %s226
      %p228 = scmp.eq.s32.totalorder %s227, 0
      %s230 = sadd.s32 %s229, 1
      %s231 = scalar_select %p228, %s229, %s230
      %p234 = pneg %p228
      %p235 = scmp.eq.s32.totalorder %s25, 3
      %p236 = por %p234, %p235
      %p237 = scmp.ne.s32.totalorder %s229, %s232
      %p238 = scmp.eq.s32.totalorder %s25, 0
      %p239 = por %p237, %p238
      %p240 = scmp.ne.s32.totalorder %s229, %s232
      %p241 = scmp.eq.s32.totalorder %s30, 3
      %p242 = por %p240, %p241
      %p243 = scmp.ne.s32.totalorder %s232, %s233
      %p244 = scmp.eq.s32.totalorder %s30, 0
      %p245 = por %p243, %p244
      %p246 = scmp.ne.s32.totalorder %s232, %s233
      %p247 = scmp.eq.s32.totalorder %s31, 3
      %p248 = por %p246, %p247
      %p250 = scmp.ne.s32.totalorder %s233, %s249
      %p251 = scmp.eq.s32.totalorder %s31, 0
      %p252 = por %p250, %p251
      %p253 = scmp.le.s32.totalorder 1, %s25
      %p254 = scmp.lt.s32.totalorder %s25, 5
      %p255 = pnand %p253, %p254
      %p256 = pneg %p255
      // Predicated region
      $region9: #{self_attention_pallas.1} parent=5 // pred_check
        _
      $region10: #{self_attention_pallas.1} parent=5 // pred_check_branch
        %258 = sbr.rel (%p255) target = $region12
      $region11: #{self_attention_pallas.1} parent=5 // pred_region
        %s259 = ssub.s32 %s25, 1
        // Predicated region
        $region13: #{self_attention_pallas.1} parent=11 // pred_check
          %p260 = pneg %p112
        $region14: #{self_attention_pallas.1} parent=11 // pred_check_branch
          %262 = sbr.rel (%p260) target = $region16
        $region15: #{self_attention_pallas.1} parent=11 // pred_region
          %s264 = ssub.s32 2048, 2048
          %265 = vsyncadd [#allocation6], %s264
          %s266 = sshll.u32 [#allocation7], 4
          %s267 = int_to_ptr.vmem [resolvable:$true] %s266
          %272 = dma.hbm_to_vmem [thread:$0]  %s2, 2048, %s267, [#allocation6], 128, 128, 8
        $region16: #{self_attention_pallas.1} parent=11 // pred_fallthru
          _
        // Predicated region
        $region17: #{self_attention_pallas.1} parent=11 // pred_check
          %p273 = pneg %p133
        $region18: #{self_attention_pallas.1} parent=11 // pred_check_branch
          %275 = sbr.rel (%p273) target = $region20
        $region19: #{self_attention_pallas.1} parent=11 // pred_region
          _
        $region20: #{self_attention_pallas.1} parent=11 // pred_fallthru
          _
        // Predicated region
        $region21: #{self_attention_pallas.1} parent=11 // pred_check
          %p276 = pneg %p154
        $region22: #{self_attention_pallas.1} parent=11 // pred_check_branch
          %278 = sbr.rel (%p276) target = $region24
        $region23: #{self_attention_pallas.1} parent=11 // pred_region
          %s280 = ssub.s32 4096, 4096
          %281 = vsyncadd [#allocation9], %s280
          %s282 = sshll.u32 [#allocation8], 4
          %s283 = int_to_ptr.vmem [resolvable:$true] %s282
          %288 = dma.hbm_to_vmem [thread:$0]  %s4, 4096, %s283, [#allocation9], 256, 256, 16
        $region24: #{self_attention_pallas.1} parent=11 // pred_fallthru
          _
        // Predicated region
        $region25: #{self_attention_pallas.1} parent=11 // pred_check
          %p289 = pneg %p175
        $region26: #{self_attention_pallas.1} parent=11 // pred_check_branch
          %291 = sbr.rel (%p289) target = $region28
        $region27: #{self_attention_pallas.1} parent=11 // pred_region
          %s293 = ssub.s32 32, 32
          %294 = vsyncadd [#allocation9], %s293
          %s296 = sshll.u32 [#allocation10], 4
          %s297 = int_to_ptr.vmem [resolvable:$true] %s296
          %299 = dma.hbm_to_vmem [thread:$0]  %s5, 32, %s297, [#allocation9]
        $region28: #{self_attention_pallas.1} parent=11 // pred_fallthru
          _
        // Predicated region
        $region29: #{self_attention_pallas.1} parent=11 // pred_check
          %p300 = pneg %p196
        $region30: #{self_attention_pallas.1} parent=11 // pred_check_branch
          %302 = sbr.rel (%p300) target = $region32
        $region31: #{self_attention_pallas.1} parent=11 // pred_region
          %s304 = ssub.s32 2048, 2048
          %305 = vsyncadd [#allocation12], %s304
          %s306 = sshll.u32 [#allocation11], 4
          %s307 = int_to_ptr.vmem [resolvable:$true] %s306
          %312 = dma.hbm_to_vmem [thread:$0]  %s6, 2048, %s307, [#allocation12], 128, 128, 8
        $region32: #{self_attention_pallas.1} parent=11 // pred_fallthru
          _
        // Predicated region
        $region33: #{self_attention_pallas.1} parent=11 // pred_check
          %p313 = pneg %p217
        $region34: #{self_attention_pallas.1} parent=11 // pred_check_branch
          %315 = sbr.rel (%p313) target = $region36
        $region35: #{self_attention_pallas.1} parent=11 // pred_region
          _
        $region36: #{self_attention_pallas.1} parent=11 // pred_fallthru
          _
      $region12: #{self_attention_pallas.1} parent=5 // pred_fallthru
        _
      %p316 = scmp.lt.s32.totalorder %s25, 4
      // Predicated region
      $region37: #{self_attention_pallas.1} parent=5 // pred_check
        %p317 = pneg %p316
      $region38: #{self_attention_pallas.1} parent=5 // pred_check_branch
        %319 = sbr.rel (%p317) target = $region40
      $region39: #{self_attention_pallas.1} parent=5 // pred_region
        // Predicated region
        $region41: #{self_attention_pallas.1} parent=39 // pred_check
          %p320 = pneg %p59
        $region42: #{self_attention_pallas.1} parent=39 // pred_check_branch
          %322 = sbr.rel (%p320) target = $region44
        $region43: #{self_attention_pallas.1} parent=39 // pred_region
          %s323 = sand.u32 %s49, 1
          %s324 = scalar_lea.sflag [#allocation3], %s323
          %s325 = sand.u32 %s49, 1
          %s326 = smul.addr %s325, 16
          %s327 = scalar_lea.vmem [#allocation2], %s326
          %s328 = smul.u32 2, %s33
          %s330 = ssub.s32 256, 256
          %331 = vsyncadd %s324, %s330
          %s332 = smul.addr %s32, 4
          %s333 = sadd.s32 %s328, %s332
          %s334 = smul.addr %s333, 128
          %s335 = scalar_lea.hbm %s0, %s334
          %s336 = sshll.u32 %s327, 4
          %s337 = int_to_ptr.vmem [resolvable:$true] %s336
          %342 = dma.hbm_to_vmem [thread:$0]  %s335, 256, %s337, %s324, 128, 128, 8
        $region44: #{self_attention_pallas.1} parent=39 // pred_fallthru
          _
        // Predicated region
        $region45: #{self_attention_pallas.1} parent=39 // pred_check
          %p343 = pneg %p85
        $region46: #{self_attention_pallas.1} parent=39 // pred_check_branch
          %345 = sbr.rel (%p343) target = $region48
        $region47: #{self_attention_pallas.1} parent=39 // pred_region
          %s346 = sand.u32 %s25, 1
          %s347 = scalar_lea.sflag [#allocation6], %s346
          %s348 = sand.u32 %s75, 1
          %s349 = smul.addr %s348, 32
          %s350 = scalar_lea.vmem [#allocation5], %s349
          %s352 = ssub.s32 512, 512
          %353 = vsyncadd %s347, %s352
          %s354 = smul.addr %s32, 4
          %s355 = smul.addr %s354, 128
          %s356 = scalar_lea.hbm %s1, %s355
          %s357 = sshll.u32 %s350, 4
          %s358 = int_to_ptr.vmem [resolvable:$true] %s357
          %363 = dma.hbm_to_vmem [thread:$0]  %s356, 512, %s358, %s347, 128, 128, 8
        $region48: #{self_attention_pallas.1} parent=39 // pred_fallthru
          _
      $region40: #{self_attention_pallas.1} parent=5 // pred_fallthru
        _
      %p364 = scmp.le.s32.totalorder 1, %s25
      %p365 = scmp.lt.s32.totalorder %s25, 5
      %p366 = pnand %p364, %p365
      %p367 = pneg %p366
      // Predicated region
      $region49: #{self_attention_pallas.1} parent=5 // pred_check
        _
      $region50: #{self_attention_pallas.1} parent=5 // pred_check_branch
        %369 = sbr.rel (%p366) target = $region52
      $region51: #{self_attention_pallas.1} parent=5 // pred_region
        %s370 = ssub.s32 %s25, 1
        %s371 = sand.u32 %s52, 1
        %s372 = scalar_lea.sflag [#allocation3], %s371
        %s373 = sand.u32 %s52, 1
        %s374 = smul.addr %s373, 16
        %s375 = scalar_lea.vmem [#allocation2], %s374
        // Predicated region
        $region53: #{self_attention_pallas.1} parent=51 // pred_check
          %p376 = pneg %p65
        $region54: #{self_attention_pallas.1} parent=51 // pred_check_branch
          %378 = sbr.rel (%p376) target = $region56
        $region55: #{self_attention_pallas.1} parent=51 // pred_region
          %379 = dma.done %s372, 256
        $region56: #{self_attention_pallas.1} parent=51 // pred_fallthru
          _
        %s380 = sand.u32 %s30, 1
        %s381 = scalar_lea.sflag [#allocation6], %s380
        %s382 = sand.u32 %s78, 1
        %s383 = smul.addr %s382, 32
        %s384 = scalar_lea.vmem [#allocation5], %s383
        // Predicated region
        $region57: #{self_attention_pallas.1} parent=51 // pred_check
          %p385 = pneg %p91
        $region58: #{self_attention_pallas.1} parent=51 // pred_check_branch
          %387 = sbr.rel (%p385) target = $region60
        $region59: #{self_attention_pallas.1} parent=51 // pred_region
          %388 = dma.done %s381, 512
        $region60: #{self_attention_pallas.1} parent=51 // pred_fallthru
          _
        // Predicated region
        $region61: #{self_attention_pallas.1} parent=51 // pred_check
          %p389 = pneg %p112
        $region62: #{self_attention_pallas.1} parent=51 // pred_check_branch
          %391 = sbr.rel (%p389) target = $region64
        $region63: #{self_attention_pallas.1} parent=51 // pred_region
          %392 = dma.done [#allocation6], 2048
        $region64: #{self_attention_pallas.1} parent=51 // pred_fallthru
          _
        // Predicated region
        $region65: #{self_attention_pallas.1} parent=51 // pred_check
          %p393 = pneg %p154
        $region66: #{self_attention_pallas.1} parent=51 // pred_check_branch
          %395 = sbr.rel (%p393) target = $region68
        $region67: #{self_attention_pallas.1} parent=51 // pred_region
          %396 = dma.done [#allocation9], 4096
        $region68: #{self_attention_pallas.1} parent=51 // pred_fallthru
          _
        // Predicated region
        $region69: #{self_attention_pallas.1} parent=51 // pred_check
          %p397 = pneg %p175
        $region70: #{self_attention_pallas.1} parent=51 // pred_check_branch
          %399 = sbr.rel (%p397) target = $region72
        $region71: #{self_attention_pallas.1} parent=51 // pred_region
          %400 = dma.done [#allocation9], 32
        $region72: #{self_attention_pallas.1} parent=51 // pred_fallthru
          _
        // Predicated region
        $region73: #{self_attention_pallas.1} parent=51 // pred_check
          %p401 = pneg %p196
        $region74: #{self_attention_pallas.1} parent=51 // pred_check_branch
          %403 = sbr.rel (%p401) target = $region76
        $region75: #{self_attention_pallas.1} parent=51 // pred_region
          %404 = dma.done [#allocation12], 2048
        $region76: #{self_attention_pallas.1} parent=51 // pred_fallthru
          _
        %s405 = sand.u32 %s52, 1
        %s406 = scalar_lea.sflag [#allocation3], %s405
        %s407 = sand.u32 %s52, 1
        %s408 = smul.addr %s407, 16
        %s409 = scalar_lea.vmem [#allocation2], %s408
        %p410 = pneg %p65
        %p411 = pneg %p62
        %s412 = sand.u32 %s30, 1
        %s413 = scalar_lea.sflag [#allocation6], %s412
        %s414 = sand.u32 %s78, 1
        %s415 = smul.addr %s414, 32
        %s416 = scalar_lea.vmem [#allocation5], %s415
        %p417 = pneg %p91
        %p418 = pneg %p88
        %p419 = pneg %p112
        %p420 = pneg %p109
        %p421 = pneg %p133
        %p422 = pneg %p130
        %p423 = pneg %p154
        %p424 = pneg %p151
        %p425 = pneg %p175
        %p426 = pneg %p172
        %p427 = pneg %p196
        %p428 = pneg %p193
        %p429 = pneg %p217
        %p430 = pneg %p214
        %p431 = pneg %p245
        %p432 = pneg %p242
        %s433 = sand.u32 %s232, 1
        %s434 = scalar_lea.sflag [#allocation4], %s433
        %s435 = sand.u32 %s232, 1
        %s436 = smul.addr %s435, 16
        %s437 = scalar_lea.vmem [#allocation13], %s436
        %s438 = smul.u32 2, %s35
        %s439 = smul.u32 2, %s35
        %v440 = vld [vmem:[%s375] sm:$0xff]
        %v441 = vld [vmem:[%s375 + $0x8] sm:$0xff]
        %v442 = vld [vmem:[%s384] sm:$0xff]
        %v443 = vld [vmem:[%s384 + $0x8] sm:$0xff]
        %v444 = vld [vmem:[%s384 + $0x10] sm:$0xff]
        %v445 = vld [vmem:[%s384 + $0x18] sm:$0xff]
        %v446 = vld [vmem:[#allocation7] sm:$0xff]
        %v447 = vld [vmem:[#allocation7 + $0x8] sm:$0xff]
        %v448 = vld [vmem:[#allocation7 + $0x10] sm:$0xff]
        %v449 = vld [vmem:[#allocation7 + $0x18] sm:$0xff]
        %v450 = vld [vmem:[#allocation7 + $0x20] sm:$0xff]
        %v451 = vld [vmem:[#allocation7 + $0x28] sm:$0xff]
        %v452 = vld [vmem:[#allocation7 + $0x30] sm:$0xff]
        %v453 = vld [vmem:[#allocation7 + $0x38] sm:$0xff]
        %v454 = vld [vmem:[#allocation7 + $0x40] sm:$0xff]
        %v455 = vld [vmem:[#allocation7 + $0x48] sm:$0xff]
        %v456 = vld [vmem:[#allocation7 + $0x50] sm:$0xff]
        %v457 = vld [vmem:[#allocation7 + $0x58] sm:$0xff]
        %v458 = vld [vmem:[#allocation7 + $0x60] sm:$0xff]
        %v459 = vld [vmem:[#allocation7 + $0x68] sm:$0xff]
        %v460 = vld [vmem:[#allocation7 + $0x70] sm:$0xff]
        %v461 = vld [vmem:[#allocation7 + $0x78] sm:$0xff]
        %v462 = vld [vmem:[%s3] sm:$0x1]
        %v464 = vlaneseq
        %v465 = vshrl.u32 %v464, 7
        %v466 = vsub.s32 0, %v465
        %v467 = vrot.slane %v462, %v466
        %469 = vmatprep.subr.mxu0 0.0
        %470 = vmatpush1.msra.mxu0 %v461
        %471 = vmatprep.subr.mxu0 0.0
        %472 = vmatpush1.msra.mxu0 %v460
        %473 = vmatprep.subr.mxu0 0.0
        %474 = vmatpush1.msra.mxu0 %v459
        %475 = vmatprep.subr.mxu0 0.0
        %476 = vmatpush1.msra.mxu0 %v458
        %477 = vmatprep.subr.mxu0 0.0
        %478 = vmatpush1.msra.mxu0 %v457
        %479 = vmatprep.subr.mxu0 0.0
        %480 = vmatpush1.msra.mxu0 %v456
        %481 = vmatprep.subr.mxu0 0.0
        %482 = vmatpush1.msra.mxu0 %v455
        %483 = vmatprep.subr.mxu0 0.0
        %484 = vmatpush1.msra.mxu0 %v454
        %485 = vmatprep.subr.mxu0 0.0
        %486 = vmatpush1.msra.mxu0 %v453
        %487 = vmatprep.subr.mxu0 0.0
        %488 = vmatpush1.msra.mxu0 %v452
        %489 = vmatprep.subr.mxu0 0.0
        %490 = vmatpush1.msra.mxu0 %v451
        %491 = vmatprep.subr.mxu0 0.0
        %492 = vmatpush1.msra.mxu0 %v450
        %493 = vmatprep.subr.mxu0 0.0
        %494 = vmatpush1.msra.mxu0 %v449
        %495 = vmatprep.subr.mxu0 0.0
        %496 = vmatpush1.msra.mxu0 %v448
        %497 = vmatprep.subr.mxu0 0.0
        %498 = vmatpush1.msra.mxu0 %v447
        %499 = vmatprep.subr.mxu0 0.0
        %500 = vmatpush1.msra.mxu0 %v446
        %501 = vmatprep.subr.mxu0 0.0
        %502 = vmatpush2.msra.mxu0 0.0
        %503 = vmatprep.subr.mxu0 0.0
        %504 = vmatpush2.msra.mxu0 0.0
        %505 = vmatprep.subr.mxu0 0.0
        %506 = vmatpush2.msra.mxu0 0.0
        %507 = vmatprep.subr.mxu0 0.0
        %508 = vmatpush2.msra.mxu0 0.0
        %509 = vmatprep.subr.mxu0 0.0
        %510 = vmatpush2.msra.mxu0 0.0
        %511 = vmatprep.subr.mxu0 0.0
        %512 = vmatpush2.msra.mxu0 0.0
        %513 = vmatprep.subr.mxu0 0.0
        %514 = vmatpush2.msra.mxu0 0.0
        %515 = vmatprep.subr.mxu0 0.0
        %516 = vmatpush2.msra.mxu0 0.0
        %517 = vmatprep.subr.mxu0 0.0
        %518 = vmatpush2.msra.mxu0 0.0
        %519 = vmatprep.subr.mxu0 0.0
        %520 = vmatpush2.msra.mxu0 0.0
        %521 = vmatprep.subr.mxu0 0.0
        %522 = vmatpush2.msra.mxu0 0.0
        %523 = vmatprep.subr.mxu0 0.0
        %524 = vmatpush2.msra.mxu0 0.0
        %525 = vmatprep.subr.mxu0 0.0
        %526 = vmatpush2.msra.mxu0 0.0
        %527 = vmatprep.subr.mxu0 0.0
        %528 = vmatpush2.msra.mxu0 0.0
        %529 = vmatprep.subr.mxu0 0.0
        %530 = vmatpush2.msra.mxu0 0.0
        %531 = vmatprep.subr.mxu0 0.0
        %532 = vmatpush2.msra.mxu0 0.0
        %533 = vmatprep.mubr.f32.mxu0 0.0
        %534 = vmatmul.mubr.f32.gmra.mxu0 %v440
        %v535 = vpop.f32.mrf.mxu0
        %v536 = vadd.f32 %v467, %v535
        %v537 = vpop.f32.mrf.mxu0
        %538 = vmatprep.mubr.f32.mxu0 0.0
        %539 = vmatmul.mubr.f32.gmra.mxu0 %v441
        %v540 = vpop.f32.mrf.mxu0
        %v541 = vadd.f32 %v467, %v540
        %v542 = vpop.f32.mrf.mxu0
        %543 = vdwg.mxu0
        %v544 = vld [vmem:[#allocation8] sm:$0xff]
        %v545 = vld [vmem:[#allocation8 + $0x8] sm:$0xff]
        %v546 = vld [vmem:[#allocation8 + $0x10] sm:$0xff]
        %v547 = vld [vmem:[#allocation8 + $0x18] sm:$0xff]
        %v548 = vld [vmem:[#allocation8 + $0x20] sm:$0xff]
        %v549 = vld [vmem:[#allocation8 + $0x28] sm:$0xff]
        %v550 = vld [vmem:[#allocation8 + $0x30] sm:$0xff]
        %v551 = vld [vmem:[#allocation8 + $0x38] sm:$0xff]
        %v552 = vld [vmem:[#allocation8 + $0x40] sm:$0xff]
        %v553 = vld [vmem:[#allocation8 + $0x48] sm:$0xff]
        %v554 = vld [vmem:[#allocation8 + $0x50] sm:$0xff]
        %v555 = vld [vmem:[#allocation8 + $0x58] sm:$0xff]
        %v556 = vld [vmem:[#allocation8 + $0x60] sm:$0xff]
        %v557 = vld [vmem:[#allocation8 + $0x68] sm:$0xff]
        %v558 = vld [vmem:[#allocation8 + $0x70] sm:$0xff]
        %v559 = vld [vmem:[#allocation8 + $0x78] sm:$0xff]
        %v560 = vld [vmem:[#allocation8 + $0x80] sm:$0xff]
        %v561 = vld [vmem:[#allocation8 + $0x88] sm:$0xff]
        %v562 = vld [vmem:[#allocation8 + $0x90] sm:$0xff]
        %v563 = vld [vmem:[#allocation8 + $0x98] sm:$0xff]
        %v564 = vld [vmem:[#allocation8 + $0xa0] sm:$0xff]
        %v565 = vld [vmem:[#allocation8 + $0xa8] sm:$0xff]
        %v566 = vld [vmem:[#allocation8 + $0xb0] sm:$0xff]
        %v567 = vld [vmem:[#allocation8 + $0xb8] sm:$0xff]
        %v568 = vld [vmem:[#allocation8 + $0xc0] sm:$0xff]
        %v569 = vld [vmem:[#allocation8 + $0xc8] sm:$0xff]
        %v570 = vld [vmem:[#allocation8 + $0xd0] sm:$0xff]
        %v571 = vld [vmem:[#allocation8 + $0xd8] sm:$0xff]
        %v572 = vld [vmem:[#allocation8 + $0xe0] sm:$0xff]
        %v573 = vld [vmem:[#allocation8 + $0xe8] sm:$0xff]
        %v574 = vld [vmem:[#allocation8 + $0xf0] sm:$0xff]
        %v575 = vld [vmem:[#allocation8 + $0xf8] sm:$0xff]
        %v576 = vld [vmem:[#allocation10] sm:$0x3]
        %v578 = vlaneseq
        %v579 = vshrl.u32 %v578, 7
        %v580 = vsub.s32 0, %v579
        %v581 = vrot.slane %v576, %v580
        %v582 = vlaneseq
        %v583 = vshrl.u32 %v582, 7
        %v584 = vsub.s32 1, %v583
        %v585 = vrot.slane %v576, %v584
        %588 = vmatprep.subr.mxu0 %v575
        %589 = vmatpush1.msra.mxu0 %v574
        %590 = vmatprep.subr.mxu0 %v573
        %591 = vmatpush1.msra.mxu0 %v572
        %592 = vmatprep.subr.mxu0 %v571
        %593 = vmatpush1.msra.mxu0 %v570
        %594 = vmatprep.subr.mxu0 %v569
        %595 = vmatpush1.msra.mxu0 %v568
        %596 = vmatprep.subr.mxu0 %v567
        %597 = vmatpush1.msra.mxu0 %v566
        %598 = vmatprep.subr.mxu0 %v565
        %599 = vmatpush1.msra.mxu0 %v564
        %600 = vmatprep.subr.mxu0 %v563
        %601 = vmatpush1.msra.mxu0 %v562
        %602 = vmatprep.subr.mxu0 %v561
        %603 = vmatpush1.msra.mxu0 %v560
        %604 = vmatprep.subr.mxu0 %v559
        %605 = vmatpush1.msra.mxu0 %v558
        %606 = vmatprep.subr.mxu0 %v557
        %607 = vmatpush1.msra.mxu0 %v556
        %608 = vmatprep.subr.mxu0 %v555
        %609 = vmatpush1.msra.mxu0 %v554
        %610 = vmatprep.subr.mxu0 %v553
        %611 = vmatpush1.msra.mxu0 %v552
        %612 = vmatprep.subr.mxu0 %v551
        %613 = vmatpush1.msra.mxu0 %v550
        %614 = vmatprep.subr.mxu0 %v549
        %615 = vmatpush1.msra.mxu0 %v548
        %616 = vmatprep.subr.mxu0 %v547
        %617 = vmatpush1.msra.mxu0 %v546
        %618 = vmatprep.subr.mxu0 %v545
        %619 = vmatpush1.msra.mxu0 %v544
        %620 = vmatprep.subr.mxu0 0.0
        %621 = vmatpush2.msra.mxu0 0.0
        %622 = vmatprep.subr.mxu0 0.0
        %623 = vmatpush2.msra.mxu0 0.0
        %624 = vmatprep.subr.mxu0 0.0
        %625 = vmatpush2.msra.mxu0 0.0
        %626 = vmatprep.subr.mxu0 0.0
        %627 = vmatpush2.msra.mxu0 0.0
        %628 = vmatprep.subr.mxu0 0.0
        %629 = vmatpush2.msra.mxu0 0.0
        %630 = vmatprep.subr.mxu0 0.0
        %631 = vmatpush2.msra.mxu0 0.0
        %632 = vmatprep.subr.mxu0 0.0
        %633 = vmatpush2.msra.mxu0 0.0
        %634 = vmatprep.subr.mxu0 0.0
        %635 = vmatpush2.msra.mxu0 0.0
        %636 = vmatprep.subr.mxu0 0.0
        %637 = vmatpush2.msra.mxu0 0.0
        %638 = vmatprep.subr.mxu0 0.0
        %639 = vmatpush2.msra.mxu0 0.0
        %640 = vmatprep.subr.mxu0 0.0
        %641 = vmatpush2.msra.mxu0 0.0
        %642 = vmatprep.subr.mxu0 0.0
        %643 = vmatpush2.msra.mxu0 0.0
        %644 = vmatprep.subr.mxu0 0.0
        %645 = vmatpush2.msra.mxu0 0.0
        %646 = vmatprep.subr.mxu0 0.0
        %647 = vmatpush2.msra.mxu0 0.0
        %648 = vmatprep.subr.mxu0 0.0
        %649 = vmatpush2.msra.mxu0 0.0
        %650 = vmatprep.subr.mxu0 0.0
        %651 = vmatpush2.msra.mxu0 0.0
        %652 = vmatprep.mubr.f32.mxu0 0.0
        %653 = vmatmul.mubr.f32.gmra.mxu0 %v442
        %v654 = vpop.f32.mrf.mxu0
        %v655 = vadd.f32 %v581, %v654
        %v656 = vpop.f32.mrf.mxu0
        %v657 = vadd.f32 %v585, %v656
        %658 = vmatprep.mubr.f32.mxu0 0.0
        %659 = vmatmul.mubr.f32.gmra.mxu0 %v443
        %v660 = vpop.f32.mrf.mxu0
        %v661 = vadd.f32 %v581, %v660
        %v662 = vpop.f32.mrf.mxu0
        %v663 = vadd.f32 %v585, %v662
        %664 = vmatprep.mubr.f32.mxu0 0.0
        %665 = vmatmul.mubr.f32.gmra.mxu0 %v444
        %v666 = vpop.f32.mrf.mxu0
        %v667 = vadd.f32 %v581, %v666
        %v668 = vpop.f32.mrf.mxu0
        %v669 = vadd.f32 %v585, %v668
        %670 = vmatprep.mubr.f32.mxu0 0.0
        %671 = vmatmul.mubr.f32.gmra.mxu0 %v445
        %v672 = vpop.f32.mrf.mxu0
        %v673 = vadd.f32 %v581, %v672
        %v674 = vpop.f32.mrf.mxu0
        %v675 = vadd.f32 %v585, %v674
        %676 = vdwg.mxu0
        %v677 = vlaneseq
        %v678 = vand.u32 %v677, 127
        %vm679 = vcmp.ge.s32.totalorder %v678, 0
        %vm680 = vcmp.lt.s32.totalorder %v678, 32
        %vm681 = vmand %vm679, %vm680
        %v682 = vsel %vm681, 1, 0
        %vm683 = vcmp.eq.s32.totalorder %v682, 1
        %v684 = vsel %vm683, %v536, 0.0
        %v685 = vsel %vm683, %v541, 0.0
        %686 = vmatprep.subr.mxu0 0.0
        %687 = vmatpush1.xpose.msra.mxu0 0.0
        %688 = vmatprep.subr.mxu0 0.0
        %689 = vmatpush1.xpose.msra.mxu0 0.0
        %690 = vmatprep.subr.mxu0 0.0
        %691 = vmatpush1.xpose.msra.mxu0 0.0
        %692 = vmatprep.subr.mxu0 0.0
        %693 = vmatpush1.xpose.msra.mxu0 0.0
        %694 = vmatprep.subr.mxu0 0.0
        %695 = vmatpush1.xpose.msra.mxu0 0.0
        %696 = vmatprep.subr.mxu0 0.0
        %697 = vmatpush1.xpose.msra.mxu0 0.0
        %698 = vmatprep.subr.mxu0 0.0
        %699 = vmatpush1.xpose.msra.mxu0 0.0
        %700 = vmatprep.subr.mxu0 0.0
        %701 = vmatpush1.xpose.msra.mxu0 0.0
        %702 = vmatprep.subr.mxu0 0.0
        %703 = vmatpush1.xpose.msra.mxu0 0.0
        %704 = vmatprep.subr.mxu0 0.0
        %705 = vmatpush1.xpose.msra.mxu0 0.0
        %706 = vmatprep.subr.mxu0 0.0
        %707 = vmatpush1.xpose.msra.mxu0 0.0
        %708 = vmatprep.subr.mxu0 0.0
        %709 = vmatpush1.xpose.msra.mxu0 0.0
        %710 = vmatprep.subr.mxu0 0.0
        %711 = vmatpush1.xpose.msra.mxu0 %v673
        %712 = vmatprep.subr.mxu0 0.0
        %713 = vmatpush1.xpose.msra.mxu0 %v667
        %714 = vmatprep.subr.mxu0 0.0
        %715 = vmatpush1.xpose.msra.mxu0 %v661
        %716 = vmatprep.subr.mxu0 0.0
        %717 = vmatpush1.xpose.msra.mxu0 %v655
        %718 = vmatprep.subr.mxu0 0.0
        %719 = vmatpush2.xpose.msra.mxu0 0.0
        %720 = vmatprep.subr.mxu0 0.0
        %721 = vmatpush2.xpose.msra.mxu0 0.0
        %722 = vmatprep.subr.mxu0 0.0
        %723 = vmatpush2.xpose.msra.mxu0 0.0
        %724 = vmatprep.subr.mxu0 0.0
        %725 = vmatpush2.xpose.msra.mxu0 0.0
        %726 = vmatprep.subr.mxu0 0.0
        %727 = vmatpush2.xpose.msra.mxu0 0.0
        %728 = vmatprep.subr.mxu0 0.0
        %729 = vmatpush2.xpose.msra.mxu0 0.0
        %730 = vmatprep.subr.mxu0 0.0
        %731 = vmatpush2.xpose.msra.mxu0 0.0
        %732 = vmatprep.subr.mxu0 0.0
        %733 = vmatpush2.xpose.msra.mxu0 0.0
        %734 = vmatprep.subr.mxu0 0.0
        %735 = vmatpush2.xpose.msra.mxu0 0.0
        %736 = vmatprep.subr.mxu0 0.0
        %737 = vmatpush2.xpose.msra.mxu0 0.0
        %738 = vmatprep.subr.mxu0 0.0
        %739 = vmatpush2.xpose.msra.mxu0 0.0
        %740 = vmatprep.subr.mxu0 0.0
        %741 = vmatpush2.xpose.msra.mxu0 0.0
        %742 = vmatprep.subr.mxu0 0.0
        %743 = vmatpush2.xpose.msra.mxu0 0.0
        %744 = vmatprep.subr.mxu0 0.0
        %745 = vmatpush2.xpose.msra.mxu0 0.0
        %746 = vmatprep.subr.mxu0 0.0
        %747 = vmatpush2.xpose.msra.mxu0 0.0
        %748 = vmatprep.subr.mxu0 0.0
        %749 = vmatpush2.xpose.msra.mxu0 0.0
        %750 = vmatprep.mubr.f32.mxu0 0.0
        %751 = vmatmul.mubr.f32.gmra.mxu0 %v684
        %v752 = vpop.f32.mrf.mxu0
        %v753 = vadd.f32 0.0, %v752
        %v754 = vpop.f32.mrf.mxu0
        %755 = vmatprep.mubr.f32.mxu0 0.0
        %756 = vmatmul.mubr.f32.gmra.mxu0 %v685
        %v757 = vpop.f32.mrf.mxu0
        %v758 = vadd.f32 0.0, %v757
        %v759 = vpop.f32.mrf.mxu0
        %760 = vdwg.mxu0
        %vm761 = vcmask 261120
        %v762 = vsel %vm761, %v753, -inf
        %763 = vmax.xlane.f32.xlu0 %v762
        %v764 = vpop.xlane.xlu0 %763
        %v765 = vsel %vm761, %v758, -inf
        %766 = vmax.xlane.f32.xlu0 %v765
        %v767 = vpop.xlane.xlu0 %766
        %v768 = vsub.f32 %v753, %v764
        %v769 = vsub.f32 %v758, %v767
        %v770 = vmul.f32 %v768, 1.442695
        %v771 = vpow.pop %v770
        %v772 = vmul.f32 %v769, 1.442695
        %v773 = vpow.pop %v772
        %v774 = vsel %vm761, %v771, 0.0
        %775 = vadd.xlane.f32.xlu0 %v774
        %v776 = vpop.xlane.xlu0 %775
        %v777 = vsel %vm761, %v773, 0.0
        %778 = vadd.xlane.f32.xlu0 %v777
        %v779 = vpop.xlane.xlu0 %778
        %v780 = vsel %vm683, %v657, 0.0
        %v781 = vsel %vm683, %v663, 0.0
        %v782 = vsel %vm683, %v669, 0.0
        %v783 = vsel %vm683, %v675, 0.0
        %v785 = vsel %vm761, %v771, 0
        %v788 = vsel %vm761, %v773, 0
        %790 = vmatprep.subr.mxu0 0.0
        %791 = vmatpush1.msra.mxu0 0.0
        %792 = vmatprep.subr.mxu0 0.0
        %793 = vmatpush1.msra.mxu0 0.0
        %794 = vmatprep.subr.mxu0 0.0
        %795 = vmatpush1.msra.mxu0 0.0
        %796 = vmatprep.subr.mxu0 0.0
        %797 = vmatpush1.msra.mxu0 0.0
        %798 = vmatprep.subr.mxu0 0.0
        %799 = vmatpush1.msra.mxu0 0.0
        %800 = vmatprep.subr.mxu0 0.0
        %801 = vmatpush1.msra.mxu0 0.0
        %802 = vmatprep.subr.mxu0 0.0
        %803 = vmatpush1.msra.mxu0 0.0
        %804 = vmatprep.subr.mxu0 0.0
        %805 = vmatpush1.msra.mxu0 0.0
        %806 = vmatprep.subr.mxu0 0.0
        %807 = vmatpush1.msra.mxu0 0.0
        %808 = vmatprep.subr.mxu0 0.0
        %809 = vmatpush1.msra.mxu0 0.0
        %810 = vmatprep.subr.mxu0 0.0
        %811 = vmatpush1.msra.mxu0 0.0
        %812 = vmatprep.subr.mxu0 0.0
        %813 = vmatpush1.msra.mxu0 0.0
        %814 = vmatprep.subr.mxu0 0.0
        %815 = vmatpush1.msra.mxu0 %v783
        %816 = vmatprep.subr.mxu0 0.0
        %817 = vmatpush1.msra.mxu0 %v782
        %818 = vmatprep.subr.mxu0 0.0
        %819 = vmatpush1.msra.mxu0 %v781
        %820 = vmatprep.subr.mxu0 0.0
        %821 = vmatpush1.msra.mxu0 %v780
        %822 = vmatprep.subr.mxu0 0.0
        %823 = vmatpush2.msra.mxu0 0.0
        %824 = vmatprep.subr.mxu0 0.0
        %825 = vmatpush2.msra.mxu0 0.0
        %826 = vmatprep.subr.mxu0 0.0
        %827 = vmatpush2.msra.mxu0 0.0
        %828 = vmatprep.subr.mxu0 0.0
        %829 = vmatpush2.msra.mxu0 0.0
        %830 = vmatprep.subr.mxu0 0.0
        %831 = vmatpush2.msra.mxu0 0.0
        %832 = vmatprep.subr.mxu0 0.0
        %833 = vmatpush2.msra.mxu0 0.0
        %834 = vmatprep.subr.mxu0 0.0
        %835 = vmatpush2.msra.mxu0 0.0
        %836 = vmatprep.subr.mxu0 0.0
        %837 = vmatpush2.msra.mxu0 0.0
        %838 = vmatprep.subr.mxu0 0.0
        %839 = vmatpush2.msra.mxu0 0.0
        %840 = vmatprep.subr.mxu0 0.0
        %841 = vmatpush2.msra.mxu0 0.0
        %842 = vmatprep.subr.mxu0 0.0
        %843 = vmatpush2.msra.mxu0 0.0
        %844 = vmatprep.subr.mxu0 0.0
        %845 = vmatpush2.msra.mxu0 0.0
        %846 = vmatprep.subr.mxu0 0.0
        %847 = vmatpush2.msra.mxu0 0.0
        %848 = vmatprep.subr.mxu0 0.0
        %849 = vmatpush2.msra.mxu0 0.0
        %850 = vmatprep.subr.mxu0 0.0
        %851 = vmatpush2.msra.mxu0 0.0
        %852 = vmatprep.subr.mxu0 0.0
        %853 = vmatpush2.msra.mxu0 0.0
        %854 = vmatprep.mubr.f32.mxu0 0.0
        %855 = vmatmul.mubr.f32.gmra.mxu0 %v785
        %v856 = vpop.f32.mrf.mxu0
        %v857 = vadd.f32 0.0, %v856
        %v858 = vpop.f32.mrf.mxu0
        %859 = vmatprep.mubr.f32.mxu0 0.0
        %860 = vmatmul.mubr.f32.gmra.mxu0 %v788
        %v861 = vpop.f32.mrf.mxu0
        %v862 = vadd.f32 0.0, %v861
        %v863 = vpop.f32.mrf.mxu0
        %864 = vdwg.mxu0
        %v865 = vrcp.pop %v776
        %v866 = vrcp.pop %v779
        %v867 = vmul.f32 %v857, %v865
        %v868 = vmul.f32 %v862, %v866
        %v869 = vadd.f32 %v867, 0.0
        %v870 = vadd.f32 %v868, 0.0
        %vm871 = vcmp.ge.s32.totalorder %v678, 32
        %vm872 = vcmp.lt.s32.totalorder %v678, 64
        %vm873 = vmand %vm871, %vm872
        %v874 = vsel %vm873, 1, 0
        %vm875 = vcmp.eq.s32.totalorder %v874, 1
        %v876 = vsel %vm875, %v536, 0.0
        %v877 = vsel %vm875, %v541, 0.0
        %878 = vmatprep.subr.mxu0 0.0
        %879 = vmatpush1.xpose.msra.mxu0 0.0
        %880 = vmatprep.subr.mxu0 0.0
        %881 = vmatpush1.xpose.msra.mxu0 0.0
        %882 = vmatprep.subr.mxu0 0.0
        %883 = vmatpush1.xpose.msra.mxu0 0.0
        %884 = vmatprep.subr.mxu0 0.0
        %885 = vmatpush1.xpose.msra.mxu0 0.0
        %886 = vmatprep.subr.mxu0 0.0
        %887 = vmatpush1.xpose.msra.mxu0 0.0
        %888 = vmatprep.subr.mxu0 0.0
        %889 = vmatpush1.xpose.msra.mxu0 0.0
        %890 = vmatprep.subr.mxu0 0.0
        %891 = vmatpush1.xpose.msra.mxu0 0.0
        %892 = vmatprep.subr.mxu0 0.0
        %893 = vmatpush1.xpose.msra.mxu0 0.0
        %894 = vmatprep.subr.mxu0 0.0
        %895 = vmatpush1.xpose.msra.mxu0 0.0
        %896 = vmatprep.subr.mxu0 0.0
        %897 = vmatpush1.xpose.msra.mxu0 0.0
        %898 = vmatprep.subr.mxu0 0.0
        %899 = vmatpush1.xpose.msra.mxu0 0.0
        %900 = vmatprep.subr.mxu0 0.0
        %901 = vmatpush1.xpose.msra.mxu0 0.0
        %902 = vmatprep.subr.mxu0 0.0
        %903 = vmatpush1.xpose.msra.mxu0 %v673
        %904 = vmatprep.subr.mxu0 0.0
        %905 = vmatpush1.xpose.msra.mxu0 %v667
        %906 = vmatprep.subr.mxu0 0.0
        %907 = vmatpush1.xpose.msra.mxu0 %v661
        %908 = vmatprep.subr.mxu0 0.0
        %909 = vmatpush1.xpose.msra.mxu0 %v655
        %910 = vmatprep.subr.mxu0 0.0
        %911 = vmatpush2.xpose.msra.mxu0 0.0
        %912 = vmatprep.subr.mxu0 0.0
        %913 = vmatpush2.xpose.msra.mxu0 0.0
        %914 = vmatprep.subr.mxu0 0.0
        %915 = vmatpush2.xpose.msra.mxu0 0.0
        %916 = vmatprep.subr.mxu0 0.0
        %917 = vmatpush2.xpose.msra.mxu0 0.0
        %918 = vmatprep.subr.mxu0 0.0
        %919 = vmatpush2.xpose.msra.mxu0 0.0
        %920 = vmatprep.subr.mxu0 0.0
        %921 = vmatpush2.xpose.msra.mxu0 0.0
        %922 = vmatprep.subr.mxu0 0.0
        %923 = vmatpush2.xpose.msra.mxu0 0.0
        %924 = vmatprep.subr.mxu0 0.0
        %925 = vmatpush2.xpose.msra.mxu0 0.0
        %926 = vmatprep.subr.mxu0 0.0
        %927 = vmatpush2.xpose.msra.mxu0 0.0
        %928 = vmatprep.subr.mxu0 0.0
        %929 = vmatpush2.xpose.msra.mxu0 0.0
        %930 = vmatprep.subr.mxu0 0.0
        %931 = vmatpush2.xpose.msra.mxu0 0.0
        %932 = vmatprep.subr.mxu0 0.0
        %933 = vmatpush2.xpose.msra.mxu0 0.0
        %934 = vmatprep.subr.mxu0 0.0
        %935 = vmatpush2.xpose.msra.mxu0 0.0
        %936 = vmatprep.subr.mxu0 0.0
        %937 = vmatpush2.xpose.msra.mxu0 0.0
        %938 = vmatprep.subr.mxu0 0.0
        %939 = vmatpush2.xpose.msra.mxu0 0.0
        %940 = vmatprep.subr.mxu0 0.0
        %941 = vmatpush2.xpose.msra.mxu0 0.0
        %942 = vmatprep.mubr.f32.mxu0 0.0
        %943 = vmatmul.mubr.f32.gmra.mxu0 %v876
        %v944 = vpop.f32.mrf.mxu0
        %v945 = vadd.f32 0.0, %v944
        %v946 = vpop.f32.mrf.mxu0
        %947 = vmatprep.mubr.f32.mxu0 0.0
        %948 = vmatmul.mubr.f32.gmra.mxu0 %v877
        %v949 = vpop.f32.mrf.mxu0
        %v950 = vadd.f32 0.0, %v949
        %v951 = vpop.f32.mrf.mxu0
        %952 = vdwg.mxu0
        %v953 = vsel %vm761, %v945, -inf
        %954 = vmax.xlane.f32.xlu0 %v953
        %v955 = vpop.xlane.xlu0 %954
        %v956 = vsel %vm761, %v950, -inf
        %957 = vmax.xlane.f32.xlu0 %v956
        %v958 = vpop.xlane.xlu0 %957
        %v959 = vsub.f32 %v945, %v955
        %v960 = vsub.f32 %v950, %v958
        %v961 = vmul.f32 %v959, 1.442695
        %v962 = vpow.pop %v961
        %v963 = vmul.f32 %v960, 1.442695
        %v964 = vpow.pop %v963
        %v965 = vsel %vm761, %v962, 0.0
        %966 = vadd.xlane.f32.xlu0 %v965
        %v967 = vpop.xlane.xlu0 %966
        %v968 = vsel %vm761, %v964, 0.0
        %969 = vadd.xlane.f32.xlu0 %v968
        %v970 = vpop.xlane.xlu0 %969
        %v971 = vsel %vm875, %v657, 0.0
        %v972 = vsel %vm875, %v663, 0.0
        %v973 = vsel %vm875, %v669, 0.0
        %v974 = vsel %vm875, %v675, 0.0
        %v976 = vsel %vm761, %v962, 0
        %v979 = vsel %vm761, %v964, 0
        %981 = vmatprep.subr.mxu0 0.0
        %982 = vmatpush1.msra.mxu0 0.0
        %983 = vmatprep.subr.mxu0 0.0
        %984 = vmatpush1.msra.mxu0 0.0
        %985 = vmatprep.subr.mxu0 0.0
        %986 = vmatpush1.msra.mxu0 0.0
        %987 = vmatprep.subr.mxu0 0.0
        %988 = vmatpush1.msra.mxu0 0.0
        %989 = vmatprep.subr.mxu0 0.0
        %990 = vmatpush1.msra.mxu0 0.0
        %991 = vmatprep.subr.mxu0 0.0
        %992 = vmatpush1.msra.mxu0 0.0
        %993 = vmatprep.subr.mxu0 0.0
        %994 = vmatpush1.msra.mxu0 0.0
        %995 = vmatprep.subr.mxu0 0.0
        %996 = vmatpush1.msra.mxu0 0.0
        %997 = vmatprep.subr.mxu0 0.0
        %998 = vmatpush1.msra.mxu0 0.0
        %999 = vmatprep.subr.mxu0 0.0
        %1000 = vmatpush1.msra.mxu0 0.0
        %1001 = vmatprep.subr.mxu0 0.0
        %1002 = vmatpush1.msra.mxu0 0.0
        %1003 = vmatprep.subr.mxu0 0.0
        %1004 = vmatpush1.msra.mxu0 0.0
        %1005 = vmatprep.subr.mxu0 0.0
        %1006 = vmatpush1.msra.mxu0 %v974
        %1007 = vmatprep.subr.mxu0 0.0
        %1008 = vmatpush1.msra.mxu0 %v973
        %1009 = vmatprep.subr.mxu0 0.0
        %1010 = vmatpush1.msra.mxu0 %v972
        %1011 = vmatprep.subr.mxu0 0.0
        %1012 = vmatpush1.msra.mxu0 %v971
        %1013 = vmatprep.subr.mxu0 0.0
        %1014 = vmatpush2.msra.mxu0 0.0
        %1015 = vmatprep.subr.mxu0 0.0
        %1016 = vmatpush2.msra.mxu0 0.0
        %1017 = vmatprep.subr.mxu0 0.0
        %1018 = vmatpush2.msra.mxu0 0.0
        %1019 = vmatprep.subr.mxu0 0.0
        %1020 = vmatpush2.msra.mxu0 0.0
        %1021 = vmatprep.subr.mxu0 0.0
        %1022 = vmatpush2.msra.mxu0 0.0
        %1023 = vmatprep.subr.mxu0 0.0
        %1024 = vmatpush2.msra.mxu0 0.0
        %1025 = vmatprep.subr.mxu0 0.0
        %1026 = vmatpush2.msra.mxu0 0.0
        %1027 = vmatprep.subr.mxu0 0.0
        %1028 = vmatpush2.msra.mxu0 0.0
        %1029 = vmatprep.subr.mxu0 0.0
        %1030 = vmatpush2.msra.mxu0 0.0
        %1031 = vmatprep.subr.mxu0 0.0
        %1032 = vmatpush2.msra.mxu0 0.0
        %1033 = vmatprep.subr.mxu0 0.0
        %1034 = vmatpush2.msra.mxu0 0.0
        %1035 = vmatprep.subr.mxu0 0.0
        %1036 = vmatpush2.msra.mxu0 0.0
        %1037 = vmatprep.subr.mxu0 0.0
        %1038 = vmatpush2.msra.mxu0 0.0
        %1039 = vmatprep.subr.mxu0 0.0
        %1040 = vmatpush2.msra.mxu0 0.0
        %1041 = vmatprep.subr.mxu0 0.0
        %1042 = vmatpush2.msra.mxu0 0.0
        %1043 = vmatprep.subr.mxu0 0.0
        %1044 = vmatpush2.msra.mxu0 0.0
        %1045 = vmatprep.mubr.f32.mxu0 0.0
        %1046 = vmatmul.mubr.f32.gmra.mxu0 %v976
        %v1047 = vpop.f32.mrf.mxu0
        %v1048 = vadd.f32 0.0, %v1047
        %v1049 = vpop.f32.mrf.mxu0
        %1050 = vmatprep.mubr.f32.mxu0 0.0
        %1051 = vmatmul.mubr.f32.gmra.mxu0 %v979
        %v1052 = vpop.f32.mrf.mxu0
        %v1053 = vadd.f32 0.0, %v1052
        %v1054 = vpop.f32.mrf.mxu0
        %1055 = vdwg.mxu0
        %v1056 = vrcp.pop %v967
        %v1057 = vrcp.pop %v970
        %v1058 = vmul.f32 %v1048, %v1056
        %v1059 = vmul.f32 %v1053, %v1057
        %v1060 = vadd.f32 %v869, %v1058
        %v1061 = vadd.f32 %v870, %v1059
        %vm1062 = vcmp.ge.s32.totalorder %v678, 64
        %vm1063 = vcmp.lt.s32.totalorder %v678, 96
        %vm1064 = vmand %vm1062, %vm1063
        %v1065 = vsel %vm1064, 1, 0
        %vm1066 = vcmp.eq.s32.totalorder %v1065, 1
        %v1067 = vsel %vm1066, %v536, 0.0
        %v1068 = vsel %vm1066, %v541, 0.0
        %1069 = vmatprep.subr.mxu0 0.0
        %1070 = vmatpush1.xpose.msra.mxu0 0.0
        %1071 = vmatprep.subr.mxu0 0.0
        %1072 = vmatpush1.xpose.msra.mxu0 0.0
        %1073 = vmatprep.subr.mxu0 0.0
        %1074 = vmatpush1.xpose.msra.mxu0 0.0
        %1075 = vmatprep.subr.mxu0 0.0
        %1076 = vmatpush1.xpose.msra.mxu0 0.0
        %1077 = vmatprep.subr.mxu0 0.0
        %1078 = vmatpush1.xpose.msra.mxu0 0.0
        %1079 = vmatprep.subr.mxu0 0.0
        %1080 = vmatpush1.xpose.msra.mxu0 0.0
        %1081 = vmatprep.subr.mxu0 0.0
        %1082 = vmatpush1.xpose.msra.mxu0 0.0
        %1083 = vmatprep.subr.mxu0 0.0
        %1084 = vmatpush1.xpose.msra.mxu0 0.0
        %1085 = vmatprep.subr.mxu0 0.0
        %1086 = vmatpush1.xpose.msra.mxu0 0.0
        %1087 = vmatprep.subr.mxu0 0.0
        %1088 = vmatpush1.xpose.msra.mxu0 0.0
        %1089 = vmatprep.subr.mxu0 0.0
        %1090 = vmatpush1.xpose.msra.mxu0 0.0
        %1091 = vmatprep.subr.mxu0 0.0
        %1092 = vmatpush1.xpose.msra.mxu0 0.0
        %1093 = vmatprep.subr.mxu0 0.0
        %1094 = vmatpush1.xpose.msra.mxu0 %v673
        %1095 = vmatprep.subr.mxu0 0.0
        %1096 = vmatpush1.xpose.msra.mxu0 %v667
        %1097 = vmatprep.subr.mxu0 0.0
        %1098 = vmatpush1.xpose.msra.mxu0 %v661
        %1099 = vmatprep.subr.mxu0 0.0
        %1100 = vmatpush1.xpose.msra.mxu0 %v655
        %1101 = vmatprep.subr.mxu0 0.0
        %1102 = vmatpush2.xpose.msra.mxu0 0.0
        %1103 = vmatprep.subr.mxu0 0.0
        %1104 = vmatpush2.xpose.msra.mxu0 0.0
        %1105 = vmatprep.subr.mxu0 0.0
        %1106 = vmatpush2.xpose.msra.mxu0 0.0
        %1107 = vmatprep.subr.mxu0 0.0
        %1108 = vmatpush2.xpose.msra.mxu0 0.0
        %1109 = vmatprep.subr.mxu0 0.0
        %1110 = vmatpush2.xpose.msra.mxu0 0.0
        %1111 = vmatprep.subr.mxu0 0.0
        %1112 = vmatpush2.xpose.msra.mxu0 0.0
        %1113 = vmatprep.subr.mxu0 0.0
        %1114 = vmatpush2.xpose.msra.mxu0 0.0
        %1115 = vmatprep.subr.mxu0 0.0
        %1116 = vmatpush2.xpose.msra.mxu0 0.0
        %1117 = vmatprep.subr.mxu0 0.0
        %1118 = vmatpush2.xpose.msra.mxu0 0.0
        %1119 = vmatprep.subr.mxu0 0.0
        %1120 = vmatpush2.xpose.msra.mxu0 0.0
        %1121 = vmatprep.subr.mxu0 0.0
        %1122 = vmatpush2.xpose.msra.mxu0 0.0
        %1123 = vmatprep.subr.mxu0 0.0
        %1124 = vmatpush2.xpose.msra.mxu0 0.0
        %1125 = vmatprep.subr.mxu0 0.0
        %1126 = vmatpush2.xpose.msra.mxu0 0.0
        %1127 = vmatprep.subr.mxu0 0.0
        %1128 = vmatpush2.xpose.msra.mxu0 0.0
        %1129 = vmatprep.subr.mxu0 0.0
        %1130 = vmatpush2.xpose.msra.mxu0 0.0
        %1131 = vmatprep.subr.mxu0 0.0
        %1132 = vmatpush2.xpose.msra.mxu0 0.0
        %1133 = vmatprep.mubr.f32.mxu0 0.0
        %1134 = vmatmul.mubr.f32.gmra.mxu0 %v1067
        %v1135 = vpop.f32.mrf.mxu0
        %v1136 = vadd.f32 0.0, %v1135
        %v1137 = vpop.f32.mrf.mxu0
        %1138 = vmatprep.mubr.f32.mxu0 0.0
        %1139 = vmatmul.mubr.f32.gmra.mxu0 %v1068
        %v1140 = vpop.f32.mrf.mxu0
        %v1141 = vadd.f32 0.0, %v1140
        %v1142 = vpop.f32.mrf.mxu0
        %1143 = vdwg.mxu0
        %v1144 = vsel %vm761, %v1136, -inf
        %1145 = vmax.xlane.f32.xlu0 %v1144
        %v1146 = vpop.xlane.xlu0 %1145
        %v1147 = vsel %vm761, %v1141, -inf
        %1148 = vmax.xlane.f32.xlu0 %v1147
        %v1149 = vpop.xlane.xlu0 %1148
        %v1150 = vsub.f32 %v1136, %v1146
        %v1151 = vsub.f32 %v1141, %v1149
        %v1152 = vmul.f32 %v1150, 1.442695
        %v1153 = vpow.pop %v1152
        %v1154 = vmul.f32 %v1151, 1.442695
        %v1155 = vpow.pop %v1154
        %v1156 = vsel %vm761, %v1153, 0.0
        %1157 = vadd.xlane.f32.xlu0 %v1156
        %v1158 = vpop.xlane.xlu0 %1157
        %v1159 = vsel %vm761, %v1155, 0.0
        %1160 = vadd.xlane.f32.xlu0 %v1159
        %v1161 = vpop.xlane.xlu0 %1160
        %v1162 = vsel %vm1066, %v657, 0.0
        %v1163 = vsel %vm1066, %v663, 0.0
        %v1164 = vsel %vm1066, %v669, 0.0
        %v1165 = vsel %vm1066, %v675, 0.0
        %v1167 = vsel %vm761, %v1153, 0
        %v1170 = vsel %vm761, %v1155, 0
        %1172 = vmatprep.subr.mxu0 0.0
        %1173 = vmatpush1.msra.mxu0 0.0
        %1174 = vmatprep.subr.mxu0 0.0
        %1175 = vmatpush1.msra.mxu0 0.0
        %1176 = vmatprep.subr.mxu0 0.0
        %1177 = vmatpush1.msra.mxu0 0.0
        %1178 = vmatprep.subr.mxu0 0.0
        %1179 = vmatpush1.msra.mxu0 0.0
        %1180 = vmatprep.subr.mxu0 0.0
        %1181 = vmatpush1.msra.mxu0 0.0
        %1182 = vmatprep.subr.mxu0 0.0
        %1183 = vmatpush1.msra.mxu0 0.0
        %1184 = vmatprep.subr.mxu0 0.0
        %1185 = vmatpush1.msra.mxu0 0.0
        %1186 = vmatprep.subr.mxu0 0.0
        %1187 = vmatpush1.msra.mxu0 0.0
        %1188 = vmatprep.subr.mxu0 0.0
        %1189 = vmatpush1.msra.mxu0 0.0
        %1190 = vmatprep.subr.mxu0 0.0
        %1191 = vmatpush1.msra.mxu0 0.0
        %1192 = vmatprep.subr.mxu0 0.0
        %1193 = vmatpush1.msra.mxu0 0.0
        %1194 = vmatprep.subr.mxu0 0.0
        %1195 = vmatpush1.msra.mxu0 0.0
        %1196 = vmatprep.subr.mxu0 0.0
        %1197 = vmatpush1.msra.mxu0 %v1165
        %1198 = vmatprep.subr.mxu0 0.0
        %1199 = vmatpush1.msra.mxu0 %v1164
        %1200 = vmatprep.subr.mxu0 0.0
        %1201 = vmatpush1.msra.mxu0 %v1163
        %1202 = vmatprep.subr.mxu0 0.0
        %1203 = vmatpush1.msra.mxu0 %v1162
        %1204 = vmatprep.subr.mxu0 0.0
        %1205 = vmatpush2.msra.mxu0 0.0
        %1206 = vmatprep.subr.mxu0 0.0
        %1207 = vmatpush2.msra.mxu0 0.0
        %1208 = vmatprep.subr.mxu0 0.0
        %1209 = vmatpush2.msra.mxu0 0.0
        %1210 = vmatprep.subr.mxu0 0.0
        %1211 = vmatpush2.msra.mxu0 0.0
        %1212 = vmatprep.subr.mxu0 0.0
        %1213 = vmatpush2.msra.mxu0 0.0
        %1214 = vmatprep.subr.mxu0 0.0
        %1215 = vmatpush2.msra.mxu0 0.0
        %1216 = vmatprep.subr.mxu0 0.0
        %1217 = vmatpush2.msra.mxu0 0.0
        %1218 = vmatprep.subr.mxu0 0.0
        %1219 = vmatpush2.msra.mxu0 0.0
        %1220 = vmatprep.subr.mxu0 0.0
        %1221 = vmatpush2.msra.mxu0 0.0
        %1222 = vmatprep.subr.mxu0 0.0
        %1223 = vmatpush2.msra.mxu0 0.0
        %1224 = vmatprep.subr.mxu0 0.0
        %1225 = vmatpush2.msra.mxu0 0.0
        %1226 = vmatprep.subr.mxu0 0.0
        %1227 = vmatpush2.msra.mxu0 0.0
        %1228 = vmatprep.subr.mxu0 0.0
        %1229 = vmatpush2.msra.mxu0 0.0
        %1230 = vmatprep.subr.mxu0 0.0
        %1231 = vmatpush2.msra.mxu0 0.0
        %1232 = vmatprep.subr.mxu0 0.0
        %1233 = vmatpush2.msra.mxu0 0.0
        %1234 = vmatprep.subr.mxu0 0.0
        %1235 = vmatpush2.msra.mxu0 0.0
        %1236 = vmatprep.mubr.f32.mxu0 0.0
        %1237 = vmatmul.mubr.f32.gmra.mxu0 %v1167
        %v1238 = vpop.f32.mrf.mxu0
        %v1239 = vadd.f32 0.0, %v1238
        %v1240 = vpop.f32.mrf.mxu0
        %1241 = vmatprep.mubr.f32.mxu0 0.0
        %1242 = vmatmul.mubr.f32.gmra.mxu0 %v1170
        %v1243 = vpop.f32.mrf.mxu0
        %v1244 = vadd.f32 0.0, %v1243
        %v1245 = vpop.f32.mrf.mxu0
        %1246 = vdwg.mxu0
        %v1247 = vrcp.pop %v1158
        %v1248 = vrcp.pop %v1161
        %v1249 = vmul.f32 %v1239, %v1247
        %v1250 = vmul.f32 %v1244, %v1248
        %v1251 = vadd.f32 %v1060, %v1249
        %v1252 = vadd.f32 %v1061, %v1250
        %vm1253 = vcmp.ge.s32.totalorder %v678, 96
        %vm1254 = vcmp.lt.s32.totalorder %v678, 128
        %vm1255 = vmand %vm1253, %vm1254
        %v1256 = vsel %vm1255, 1, 0
        %vm1257 = vcmp.eq.s32.totalorder %v1256, 1
        %v1258 = vsel %vm1257, %v536, 0.0
        %v1259 = vsel %vm1257, %v541, 0.0
        %1260 = vmatprep.subr.mxu0 0.0
        %1261 = vmatpush1.xpose.msra.mxu0 0.0
        %1262 = vmatprep.subr.mxu0 0.0
        %1263 = vmatpush1.xpose.msra.mxu0 0.0
        %1264 = vmatprep.subr.mxu0 0.0
        %1265 = vmatpush1.xpose.msra.mxu0 0.0
        %1266 = vmatprep.subr.mxu0 0.0
        %1267 = vmatpush1.xpose.msra.mxu0 0.0
        %1268 = vmatprep.subr.mxu0 0.0
        %1269 = vmatpush1.xpose.msra.mxu0 0.0
        %1270 = vmatprep.subr.mxu0 0.0
        %1271 = vmatpush1.xpose.msra.mxu0 0.0
        %1272 = vmatprep.subr.mxu0 0.0
        %1273 = vmatpush1.xpose.msra.mxu0 0.0
        %1274 = vmatprep.subr.mxu0 0.0
        %1275 = vmatpush1.xpose.msra.mxu0 0.0
        %1276 = vmatprep.subr.mxu0 0.0
        %1277 = vmatpush1.xpose.msra.mxu0 0.0
        %1278 = vmatprep.subr.mxu0 0.0
        %1279 = vmatpush1.xpose.msra.mxu0 0.0
        %1280 = vmatprep.subr.mxu0 0.0
        %1281 = vmatpush1.xpose.msra.mxu0 0.0
        %1282 = vmatprep.subr.mxu0 0.0
        %1283 = vmatpush1.xpose.msra.mxu0 0.0
        %1284 = vmatprep.subr.mxu0 0.0
        %1285 = vmatpush1.xpose.msra.mxu0 %v673
        %1286 = vmatprep.subr.mxu0 0.0
        %1287 = vmatpush1.xpose.msra.mxu0 %v667
        %1288 = vmatprep.subr.mxu0 0.0
        %1289 = vmatpush1.xpose.msra.mxu0 %v661
        %1290 = vmatprep.subr.mxu0 0.0
        %1291 = vmatpush1.xpose.msra.mxu0 %v655
        %1292 = vmatprep.subr.mxu0 0.0
        %1293 = vmatpush2.xpose.msra.mxu0 0.0
        %1294 = vmatprep.subr.mxu0 0.0
        %1295 = vmatpush2.xpose.msra.mxu0 0.0
        %1296 = vmatprep.subr.mxu0 0.0
        %1297 = vmatpush2.xpose.msra.mxu0 0.0
        %1298 = vmatprep.subr.mxu0 0.0
        %1299 = vmatpush2.xpose.msra.mxu0 0.0
        %1300 = vmatprep.subr.mxu0 0.0
        %1301 = vmatpush2.xpose.msra.mxu0 0.0
        %1302 = vmatprep.subr.mxu0 0.0
        %1303 = vmatpush2.xpose.msra.mxu0 0.0
        %1304 = vmatprep.subr.mxu0 0.0
        %1305 = vmatpush2.xpose.msra.mxu0 0.0
        %1306 = vmatprep.subr.mxu0 0.0
        %1307 = vmatpush2.xpose.msra.mxu0 0.0
        %1308 = vmatprep.subr.mxu0 0.0
        %1309 = vmatpush2.xpose.msra.mxu0 0.0
        %1310 = vmatprep.subr.mxu0 0.0
        %1311 = vmatpush2.xpose.msra.mxu0 0.0
        %1312 = vmatprep.subr.mxu0 0.0
        %1313 = vmatpush2.xpose.msra.mxu0 0.0
        %1314 = vmatprep.subr.mxu0 0.0
        %1315 = vmatpush2.xpose.msra.mxu0 0.0
        %1316 = vmatprep.subr.mxu0 0.0
        %1317 = vmatpush2.xpose.msra.mxu0 0.0
        %1318 = vmatprep.subr.mxu0 0.0
        %1319 = vmatpush2.xpose.msra.mxu0 0.0
        %1320 = vmatprep.subr.mxu0 0.0
        %1321 = vmatpush2.xpose.msra.mxu0 0.0
        %1322 = vmatprep.subr.mxu0 0.0
        %1323 = vmatpush2.xpose.msra.mxu0 0.0
        %1324 = vmatprep.mubr.f32.mxu0 0.0
        %1325 = vmatmul.mubr.f32.gmra.mxu0 %v1258
        %v1326 = vpop.f32.mrf.mxu0
        %v1327 = vadd.f32 0.0, %v1326
        %v1328 = vpop.f32.mrf.mxu0
        %1329 = vmatprep.mubr.f32.mxu0 0.0
        %1330 = vmatmul.mubr.f32.gmra.mxu0 %v1259
        %v1331 = vpop.f32.mrf.mxu0
        %v1332 = vadd.f32 0.0, %v1331
        %v1333 = vpop.f32.mrf.mxu0
        %1334 = vdwg.mxu0
        %v1335 = vsel %vm761, %v1327, -inf
        %1336 = vmax.xlane.f32.xlu0 %v1335
        %v1337 = vpop.xlane.xlu0 %1336
        %v1338 = vsel %vm761, %v1332, -inf
        %1339 = vmax.xlane.f32.xlu0 %v1338
        %v1340 = vpop.xlane.xlu0 %1339
        %v1341 = vsub.f32 %v1327, %v1337
        %v1342 = vsub.f32 %v1332, %v1340
        %v1343 = vmul.f32 %v1341, 1.442695
        %v1344 = vpow.pop %v1343
        %v1345 = vmul.f32 %v1342, 1.442695
        %v1346 = vpow.pop %v1345
        %v1347 = vsel %vm761, %v1344, 0.0
        %1348 = vadd.xlane.f32.xlu0 %v1347
        %v1349 = vpop.xlane.xlu0 %1348
        %v1350 = vsel %vm761, %v1346, 0.0
        %1351 = vadd.xlane.f32.xlu0 %v1350
        %v1352 = vpop.xlane.xlu0 %1351
        %v1353 = vsel %vm1257, %v657, 0.0
        %v1354 = vsel %vm1257, %v663, 0.0
        %v1355 = vsel %vm1257, %v669, 0.0
        %v1356 = vsel %vm1257, %v675, 0.0
        %v1358 = vsel %vm761, %v1344, 0
        %v1361 = vsel %vm761, %v1346, 0
        %1363 = vmatprep.subr.mxu0 0.0
        %1364 = vmatpush1.msra.mxu0 0.0
        %1365 = vmatprep.subr.mxu0 0.0
        %1366 = vmatpush1.msra.mxu0 0.0
        %1367 = vmatprep.subr.mxu0 0.0
        %1368 = vmatpush1.msra.mxu0 0.0
        %1369 = vmatprep.subr.mxu0 0.0
        %1370 = vmatpush1.msra.mxu0 0.0
        %1371 = vmatprep.subr.mxu0 0.0
        %1372 = vmatpush1.msra.mxu0 0.0
        %1373 = vmatprep.subr.mxu0 0.0
        %1374 = vmatpush1.msra.mxu0 0.0
        %1375 = vmatprep.subr.mxu0 0.0
        %1376 = vmatpush1.msra.mxu0 0.0
        %1377 = vmatprep.subr.mxu0 0.0
        %1378 = vmatpush1.msra.mxu0 0.0
        %1379 = vmatprep.subr.mxu0 0.0
        %1380 = vmatpush1.msra.mxu0 0.0
        %1381 = vmatprep.subr.mxu0 0.0
        %1382 = vmatpush1.msra.mxu0 0.0
        %1383 = vmatprep.subr.mxu0 0.0
        %1384 = vmatpush1.msra.mxu0 0.0
        %1385 = vmatprep.subr.mxu0 0.0
        %1386 = vmatpush1.msra.mxu0 0.0
        %1387 = vmatprep.subr.mxu0 0.0
        %1388 = vmatpush1.msra.mxu0 %v1356
        %1389 = vmatprep.subr.mxu0 0.0
        %1390 = vmatpush1.msra.mxu0 %v1355
        %1391 = vmatprep.subr.mxu0 0.0
        %1392 = vmatpush1.msra.mxu0 %v1354
        %1393 = vmatprep.subr.mxu0 0.0
        %1394 = vmatpush1.msra.mxu0 %v1353
        %1395 = vmatprep.subr.mxu0 0.0
        %1396 = vmatpush2.msra.mxu0 0.0
        %1397 = vmatprep.subr.mxu0 0.0
        %1398 = vmatpush2.msra.mxu0 0.0
        %1399 = vmatprep.subr.mxu0 0.0
        %1400 = vmatpush2.msra.mxu0 0.0
        %1401 = vmatprep.subr.mxu0 0.0
        %1402 = vmatpush2.msra.mxu0 0.0
        %1403 = vmatprep.subr.mxu0 0.0
        %1404 = vmatpush2.msra.mxu0 0.0
        %1405 = vmatprep.subr.mxu0 0.0
        %1406 = vmatpush2.msra.mxu0 0.0
        %1407 = vmatprep.subr.mxu0 0.0
        %1408 = vmatpush2.msra.mxu0 0.0
        %1409 = vmatprep.subr.mxu0 0.0
        %1410 = vmatpush2.msra.mxu0 0.0
        %1411 = vmatprep.subr.mxu0 0.0
        %1412 = vmatpush2.msra.mxu0 0.0
        %1413 = vmatprep.subr.mxu0 0.0
        %1414 = vmatpush2.msra.mxu0 0.0
        %1415 = vmatprep.subr.mxu0 0.0
        %1416 = vmatpush2.msra.mxu0 0.0
        %1417 = vmatprep.subr.mxu0 0.0
        %1418 = vmatpush2.msra.mxu0 0.0
        %1419 = vmatprep.subr.mxu0 0.0
        %1420 = vmatpush2.msra.mxu0 0.0
        %1421 = vmatprep.subr.mxu0 0.0
        %1422 = vmatpush2.msra.mxu0 0.0
        %1423 = vmatprep.subr.mxu0 0.0
        %1424 = vmatpush2.msra.mxu0 0.0
        %1425 = vmatprep.subr.mxu0 0.0
        %1426 = vmatpush2.msra.mxu0 0.0
        %1427 = vmatprep.mubr.f32.mxu0 0.0
        %1428 = vmatmul.mubr.f32.gmra.mxu0 %v1358
        %v1429 = vpop.f32.mrf.mxu0
        %v1430 = vadd.f32 0.0, %v1429
        %v1431 = vpop.f32.mrf.mxu0
        %1432 = vmatprep.mubr.f32.mxu0 0.0
        %1433 = vmatmul.mubr.f32.gmra.mxu0 %v1361
        %v1434 = vpop.f32.mrf.mxu0
        %v1435 = vadd.f32 0.0, %v1434
        %v1436 = vpop.f32.mrf.mxu0
        %1437 = vdwg.mxu0
        %v1438 = vrcp.pop %v1349
        %v1439 = vrcp.pop %v1352
        %v1440 = vmul.f32 %v1430, %v1438
        %v1441 = vmul.f32 %v1435, %v1439
        %v1442 = vadd.f32 %v1251, %v1440
        %v1443 = vadd.f32 %v1252, %v1441
        %v1444 = vld [vmem:[#allocation11] sm:$0xff]
        %v1445 = vld [vmem:[#allocation11 + $0x8] sm:$0xff]
        %v1446 = vld [vmem:[#allocation11 + $0x10] sm:$0xff]
        %v1447 = vld [vmem:[#allocation11 + $0x18] sm:$0xff]
        %v1448 = vld [vmem:[#allocation11 + $0x20] sm:$0xff]
        %v1449 = vld [vmem:[#allocation11 + $0x28] sm:$0xff]
        %v1450 = vld [vmem:[#allocation11 + $0x30] sm:$0xff]
        %v1451 = vld [vmem:[#allocation11 + $0x38] sm:$0xff]
        %v1452 = vld [vmem:[#allocation11 + $0x40] sm:$0xff]
        %v1453 = vld [vmem:[#allocation11 + $0x48] sm:$0xff]
        %v1454 = vld [vmem:[#allocation11 + $0x50] sm:$0xff]
        %v1455 = vld [vmem:[#allocation11 + $0x58] sm:$0xff]
        %v1456 = vld [vmem:[#allocation11 + $0x60] sm:$0xff]
        %v1457 = vld [vmem:[#allocation11 + $0x68] sm:$0xff]
        %v1458 = vld [vmem:[#allocation11 + $0x70] sm:$0xff]
        %v1459 = vld [vmem:[#allocation11 + $0x78] sm:$0xff]
        %v1460 = vld [vmem:[%s7] sm:$0x1]
        %v1462 = vlaneseq
        %v1463 = vshrl.u32 %v1462, 7
        %v1464 = vsub.s32 0, %v1463
        %v1465 = vrot.slane %v1460, %v1464
        %1467 = vmatprep.subr.mxu0 0.0
        %1468 = vmatpush1.msra.mxu0 %v1459
        %1469 = vmatprep.subr.mxu0 0.0
        %1470 = vmatpush1.msra.mxu0 %v1458
        %1471 = vmatprep.subr.mxu0 0.0
        %1472 = vmatpush1.msra.mxu0 %v1457
        %1473 = vmatprep.subr.mxu0 0.0
        %1474 = vmatpush1.msra.mxu0 %v1456
        %1475 = vmatprep.subr.mxu0 0.0
        %1476 = vmatpush1.msra.mxu0 %v1455
        %1477 = vmatprep.subr.mxu0 0.0
        %1478 = vmatpush1.msra.mxu0 %v1454
        %1479 = vmatprep.subr.mxu0 0.0
        %1480 = vmatpush1.msra.mxu0 %v1453
        %1481 = vmatprep.subr.mxu0 0.0
        %1482 = vmatpush1.msra.mxu0 %v1452
        %1483 = vmatprep.subr.mxu0 0.0
        %1484 = vmatpush1.msra.mxu0 %v1451
        %1485 = vmatprep.subr.mxu0 0.0
        %1486 = vmatpush1.msra.mxu0 %v1450
        %1487 = vmatprep.subr.mxu0 0.0
        %1488 = vmatpush1.msra.mxu0 %v1449
        %1489 = vmatprep.subr.mxu0 0.0
        %1490 = vmatpush1.msra.mxu0 %v1448
        %1491 = vmatprep.subr.mxu0 0.0
        %1492 = vmatpush1.msra.mxu0 %v1447
        %1493 = vmatprep.subr.mxu0 0.0
        %1494 = vmatpush1.msra.mxu0 %v1446
        %1495 = vmatprep.subr.mxu0 0.0
        %1496 = vmatpush1.msra.mxu0 %v1445
        %1497 = vmatprep.subr.mxu0 0.0
        %1498 = vmatpush1.msra.mxu0 %v1444
        %1499 = vmatprep.subr.mxu0 0.0
        %1500 = vmatpush2.msra.mxu0 0.0
        %1501 = vmatprep.subr.mxu0 0.0
        %1502 = vmatpush2.msra.mxu0 0.0
        %1503 = vmatprep.subr.mxu0 0.0
        %1504 = vmatpush2.msra.mxu0 0.0
        %1505 = vmatprep.subr.mxu0 0.0
        %1506 = vmatpush2.msra.mxu0 0.0
        %1507 = vmatprep.subr.mxu0 0.0
        %1508 = vmatpush2.msra.mxu0 0.0
        %1509 = vmatprep.subr.mxu0 0.0
        %1510 = vmatpush2.msra.mxu0 0.0
        %1511 = vmatprep.subr.mxu0 0.0
        %1512 = vmatpush2.msra.mxu0 0.0
        %1513 = vmatprep.subr.mxu0 0.0
        %1514 = vmatpush2.msra.mxu0 0.0
        %1515 = vmatprep.subr.mxu0 0.0
        %1516 = vmatpush2.msra.mxu0 0.0
        %1517 = vmatprep.subr.mxu0 0.0
        %1518 = vmatpush2.msra.mxu0 0.0
        %1519 = vmatprep.subr.mxu0 0.0
        %1520 = vmatpush2.msra.mxu0 0.0
        %1521 = vmatprep.subr.mxu0 0.0
        %1522 = vmatpush2.msra.mxu0 0.0
        %1523 = vmatprep.subr.mxu0 0.0
        %1524 = vmatpush2.msra.mxu0 0.0
        %1525 = vmatprep.subr.mxu0 0.0
        %1526 = vmatpush2.msra.mxu0 0.0
        %1527 = vmatprep.subr.mxu0 0.0
        %1528 = vmatpush2.msra.mxu0 0.0
        %1529 = vmatprep.subr.mxu0 0.0
        %1530 = vmatpush2.msra.mxu0 0.0
        %1531 = vmatprep.mubr.f32.mxu0 0.0
        %1532 = vmatmul.mubr.f32.gmra.mxu0 %v1442
        %v1533 = vpop.f32.mrf.mxu0
        %v1534 = vadd.f32 %v1465, %v1533
        %v1535 = vpop.f32.mrf.mxu0
        %1536 = vmatprep.mubr.f32.mxu0 0.0
        %1537 = vmatmul.mubr.f32.gmra.mxu0 %v1443
        %v1538 = vpop.f32.mrf.mxu0
        %v1539 = vadd.f32 %v1465, %v1538
        %v1540 = vpop.f32.mrf.mxu0
        %1541 = vdwg.mxu0
        %1542 = vst [vmem:[%s437] sm:$0xff] %v1534
        %1543 = vst [vmem:[%s437 + $0x8] sm:$0xff] %v1539
        %s1544 = sand.u32 %s232, 1
        %s1545 = scalar_lea.sflag [#allocation4], %s1544
        %s1546 = sand.u32 %s232, 1
        %s1547 = smul.addr %s1546, 16
        %s1548 = scalar_lea.vmem [#allocation13], %s1547
        // Predicated region
        $region77: #{self_attention_pallas.1} parent=51 // pred_check
          %p1549 = pneg %p242
        $region78: #{self_attention_pallas.1} parent=51 // pred_check_branch
          %1551 = sbr.rel (%p1549) target = $region80
        $region79: #{self_attention_pallas.1} parent=51 // pred_region
          %s1552 = smul.u32 2, %s35
          %s1554 = ssub.s32 256, 256
          %1555 = vsyncadd %s1545, %s1554
          %s1556 = smul.addr %s34, 4
          %s1557 = sadd.s32 %s1552, %s1556
          %s1558 = smul.addr %s1557, 128
          %s1559 = scalar_lea.hbm %s8, %s1558
          %s1560 = sshll.u32 %s1548, 4
          %s1561 = int_to_ptr.vmem [resolvable:$true] %s1560
          %1566 = dma.vmem_to_hbm [thread:$0]  %s1561, 256, %s1559, %s1545, 128, 128, 8
        $region80: #{self_attention_pallas.1} parent=51 // pred_fallthru
          _
      $region52: #{self_attention_pallas.1} parent=5 // pred_fallthru
        _
      %p1567 = scmp.le.s32.totalorder 2, %s25
      // Predicated region
      $region81: #{self_attention_pallas.1} parent=5 // pred_check
        %p1568 = pneg %p1567
      $region82: #{self_attention_pallas.1} parent=5 // pred_check_branch
        %1570 = sbr.rel (%p1568) target = $region84
      $region83: #{self_attention_pallas.1} parent=5 // pred_region
        %s1571 = ssub.s32 %s25, 2
        // Predicated region
        $region85: #{self_attention_pallas.1} parent=83 // pred_check
          %p1572 = pneg %p248
        $region86: #{self_attention_pallas.1} parent=83 // pred_check_branch
          %1574 = sbr.rel (%p1572) target = $region88
        $region87: #{self_attention_pallas.1} parent=83 // pred_region
          %s1575 = sand.u32 %s233, 1
          %s1576 = scalar_lea.sflag [#allocation4], %s1575
          %s1577 = sand.u32 %s233, 1
          %s1578 = smul.addr %s1577, 16
          %s1579 = scalar_lea.vmem [#allocation13], %s1578
          %1580 = dma.done %s1576, 256
        $region88: #{self_attention_pallas.1} parent=83 // pred_fallthru
          _
      $region84: #{self_attention_pallas.1} parent=5 // pred_fallthru
        _
    $region6: #{self_attention_pallas.1} parent=1 // loop_footer
      %s29 = sadd.s32 1, %s25
    $region7: #{self_attention_pallas.1} parent=1 // loop_footer_branch
      %24 = sbr.rel target = $region3
    $region8: #{self_attention_pallas.1} parent=1 // loop_exit
      _
    %1581 = vsyncpa [#allocation3], 1
    %s1582 = scalar_lea.sflag [#allocation3], 1
    %1583 = vsyncpa %s1582, 1
    %1584 = vsyncpa [#allocation6], 1
    %s1585 = scalar_lea.sflag [#allocation6], 1
    %1586 = vsyncpa %s1585, 1
    %1587 = vsyncpa [#allocation9], 1
    %1588 = vsyncpa [#allocation12], 1
    %1589 = vsyncpa [#allocation4], 1
    %s1590 = scalar_lea.sflag [#allocation4], 1
    %1591 = vsyncpa %s1590, 1

</llo_original>
